<compile_context>
chip_gen: v7x
topology: tpu7x:2x2x1
jax: 0.10.0
libtpu: 0.0.40
codegen_flags: <defaults>
</compile_context>

<pallas_src>
import functools

import jax
import jax.numpy as jnp
from jax.experimental import pallas as pl
from jax.experimental.pallas import tpu as pltpu

IN_DIM = 96
HID_DIM = 32
OUT_DIM = 1
EPS = 1e-5                      # BatchNorm1d default eps
W_ROWS = IN_DIM + 2 * HID_DIM   # packed weight rows: 96 + 32 + 32 = 160
TILE_GRAN = 1024                # row granularity of multi-step tiles
                                # (keeps the (tile//128, 128) out block 8-row aligned)


def _round_up(x, m):
    return (x + m - 1) // m * m


# ----------------------------- kernel ---------------------------------------


def decoder_kernel(x_ref, w_ref, b0_ref, b1_ref, b2_ref, o_ref, *, lane_dense):
    # In-kernel cast (perf lever #1): x arrives as f32 straight from HBM.
    x = x_ref[...].astype(jnp.bfloat16)

    # Packed, BN-folded weights (all slice offsets are 16-row aligned).
    w0 = w_ref[0:IN_DIM, :]                                   # (96, 32) bf16
    w1 = w_ref[IN_DIM:IN_DIM + HID_DIM, :]                    # (32, 32) bf16
    w2 = w_ref[IN_DIM + HID_DIM:, 0:OUT_DIM]                  # (32, 1)  bf16

    # Layer 0: folded Linear(96,32)+BN -> ReLU   (bf16 MXU, f32 accumulate)
    h = jnp.dot(x, w0, preferred_element_type=jnp.float32)
    h = jnp.maximum(h + b0_ref[...], 0.0)

    # Layer 1: folded Linear(32,32)+BN -> ReLU
    h = jnp.dot(h.astype(jnp.bfloat16), w1, preferred_element_type=jnp.float32)
    h = jnp.maximum(h + b1_ref[...], 0.0)

    # Layer 2: folded Linear(32,1)+BN -> Sigmoid
    h = jnp.dot(h.astype(jnp.bfloat16), w2, preferred_element_type=jnp.float32)

    if lane_dense:
        # Relayout the (tile, 1) column into a lane-dense (tile//128, 128)
        # block so bias+sigmoid and the store run on full vregs.
        h = h.reshape(o_ref.shape)

    o_ref[...] = jax.nn.sigmoid(h + b2_ref[...])


# ----------------------------- wrapper ---------------------------------------


def decoder_forward(x, params, *, tile_b=8192, lane_dense=True):
    """x: (N, IN_DIM) f32. params: (wpack, b0, b1, b2) from fold_bn."""
    wpack, b0, b1, b2 = params
    n, f = x.shape
    assert f == IN_DIM

    # Tile sizing: as large as tile_b, but keep >= 4 grid steps when there is
    # enough work (megacore on v7x + pipeline overlap); single full tile for
    # small batches.  Multi-step tiles are multiples of TILE_GRAN rows.
    n_ceil = _round_up(n, 128)
    cap = max(TILE_GRAN, _round_up(pl.cdiv(n, 4), TILE_GRAN))
    tile_eff = min(_round_up(max(tile_b, TILE_GRAN), TILE_GRAN), cap,
                   _round_up(n_ceil, TILE_GRAN))
    if tile_eff >= n_ceil:
        tile_eff = n_ceil                     # one grid step covers everything
    grid = pl.cdiv(n, tile_eff)               # ragged edge handled by Pallas
    g_rows = tile_eff // 128

    in_specs = [
        pl.BlockSpec((tile_eff, IN_DIM), lambda i: (i, 0)),    # x (f32)
        pl.BlockSpec((W_ROWS, HID_DIM), lambda i: (0, 0)),     # packed weights
        pl.BlockSpec((1, HID_DIM), lambda i: (0, 0)),          # b0
        pl.BlockSpec((1, HID_DIM), lambda i: (0, 0)),          # b1
        pl.BlockSpec((1, OUT_DIM), lambda i: (0, 0)),          # b2
    ]

    x_block_bytes = tile_eff * IN_DIM * 4
    vmem_limit = int(min(64 * 1024 * 1024,
                         max(32 * 1024 * 1024, 4 * x_block_bytes)))
    compiler_params = pltpu.CompilerParams(
        dimension_semantics=("parallel",),
        vmem_limit_bytes=vmem_limit)

    flops = 2 * n * (IN_DIM * HID_DIM + HID_DIM * HID_DIM + HID_DIM * OUT_DIM)
    bytes_accessed = int(n * IN_DIM * 4 + n * OUT_DIM * 4
                         + wpack.size * wpack.dtype.itemsize
                         + (b0.size + b1.size + b2.size) * 4)
    cost = pl.CostEstimate(flops=flops, transcendentals=n,
                           bytes_accessed=bytes_accessed)

    def run(dense):
        kernel = functools.partial(decoder_kernel, lane_dense=dense)
        if dense:
            out_shape = jax.ShapeDtypeStruct((grid * g_rows, 128), jnp.float32)
            out_spec = pl.BlockSpec((g_rows, 128), lambda i: (i, 0))
        else:
            out_shape = jax.ShapeDtypeStruct((grid * tile_eff, OUT_DIM),
                                             jnp.float32)
            out_spec = pl.BlockSpec((tile_eff, OUT_DIM), lambda i: (i, 0))
        out = pl.pallas_call(
            kernel,
            out_shape=out_shape,
            grid=(grid,),
            in_specs=in_specs,
            out_specs=out_spec,
            compiler_params=compiler_params,
            cost_estimate=cost,
        )(x, wpack, b0, b1, b2)
        if dense:
            # (grid*g_rows, 128) row-major == row order of the logical output.
            return out.reshape(-1, 1)[:n]
        return out[:n]

    if lane_dense:
        try:
            return run(True)
        except Exception:  # lowering fallback: direct lane-sparse (N, 1) store
            pass
    return run(False)


# ----------------------------- parameters ------------------------------------


def init_params(key):
    """Deterministic synthetic raw parameters (un-folded). Linear weights are
    stored as (in, out) so the kernel computes x @ W (== PyTorch x @ W_pt^T).
    Per-feature BN vectors are stored as (1, dim)."""
    dims = [(IN_DIM, HID_DIM), (HID_DIM, HID_DIM), (HID_DIM, OUT_DIM)]
    params = []
    for (din, dout) in dims:
        key, k_w, k_b, k_g, k_be, k_m, k_v = jax.random.split(key, 7)
        scale = 1.0 / jnp.sqrt(din)
        w = jax.random.uniform(k_w, (din, dout), jnp.float32, -scale, scale)
        b = jax.random.uniform(k_b, (1, dout), jnp.float32, -scale, scale)
        gamma = 1.0 + 0.1 * jax.random.normal(k_g, (1, dout), jnp.float32)
        beta = 0.1 * jax.random.normal(k_be, (1, dout), jnp.float32)
        mean = 0.1 * jax.random.normal(k_m, (1, dout), jnp.float32)
        var = jnp.abs(jax.random.normal(k_v, (1, dout), jnp.float32)) + 0.5
        params += [w, b, gamma, beta, mean, var]
    return tuple(params)


def fold_bn(raw_params):
    """Fold eval-mode BatchNorm1d into the preceding Linear (host-side, f32),
    cast weights to bf16 and pack them into one (160, 32) array.
    Returns (wpack, b0, b1, b2)."""
    ws, bs = [], []
    for l in range(3):
        w, b, g, be, m, v = raw_params[6 * l:6 * l + 6]
        s = g * jax.lax.rsqrt(v + EPS)                  # (1, dout)
        ws.append((w * s).astype(jnp.bfloat16))          # (din, dout)
        bs.append(((b - m) * s + be).astype(jnp.float32))  # (1, dout)
    w2p = jnp.zeros((HID_DIM, HID_DIM), jnp.bfloat16).at[:, :OUT_DIM].set(ws[2])
    wpack = jnp.concatenate([ws[0], ws[1], w2p], axis=0)  # (160, 32) bf16
    return wpack, bs[0], bs[1], bs[2]


# ----------------------------- references ------------------------------------


def decoder_reference_f32(x, raw_params):
    """Plain-JAX f32 reference of the original eval-mode forward (unfused BN)."""
    out = x
    for l in range(3):
        w, b, g, be, m, v = raw_params[6 * l:6 * l + 6]
        out = out @ w + b
        out = (out - m) * (g * jax.lax.rsqrt(v + EPS)) + be
        if l < 2:
            out = jnp.maximum(out, 0.0)
    return jax.nn.sigmoid(out)


def decoder_reference_folded(x, params):
    """Plain-JAX reference of the exact kernel math (bf16 matmul inputs,
    unpacked from the packed weight array)."""
    wpack, b0, b1, b2 = params
    w0 = wpack[0:IN_DIM, :]
    w1 = wpack[IN_DIM:IN_DIM + HID_DIM, :]
    w2 = wpack[IN_DIM + HID_DIM:, 0:OUT_DIM]
    h = x.astype(jnp.bfloat16)
    h = jnp.maximum(jnp.dot(h, w0, preferred_element_type=jnp.float32) + b0, 0.0)
    h = jnp.maximum(jnp.dot(h.astype(jnp.bfloat16), w1,
                            preferred_element_type=jnp.float32) + b1, 0.0)
    h = jnp.dot(h.astype(jnp.bfloat16), w2,
                preferred_element_type=jnp.float32) + b2
    return jax.nn.sigmoid(h)


# ----------------------------- test ------------------------------------------


if __name__ == "__main__":
    key = jax.random.PRNGKey(0)
    k_x, k_x2, k_x3, k_p = jax.random.split(key, 4)

    raw = init_params(k_p)
    packed = fold_bn(raw)

    # Small batch (single grid step, partial input block).
    N = 16
    x = jax.random.normal(k_x, (N, IN_DIM), jnp.float32)
    out = jax.block_until_ready(decoder_forward(x, packed))
    assert out.shape == (N, OUT_DIM)
    assert jnp.allclose(out, decoder_reference_folded(x, packed), atol=1e-3), \
        "mismatch vs folded bf16 reference"
    assert jnp.allclose(out, decoder_reference_f32(x, raw), atol=2e-2), \
        "mismatch vs f32 eval-mode reference"

    # Ragged batch, single tile covering all rows.
    N2 = 200
    x2 = jax.random.normal(k_x2, (N2, IN_DIM), jnp.float32)
    out2 = jax.block_until_ready(decoder_forward(x2, packed))
    assert out2.shape == (N2, OUT_DIM)
    assert jnp.allclose(out2, decoder_reference_folded(x2, packed), atol=1e-3), \
        "mismatch vs folded bf16 reference (single-tile ragged)"

    # Ragged batch + multi-step grid (exercises the edge-block path).
    N3 = 1037
    x3 = jax.random.normal(k_x3, (N3, IN_DIM), jnp.float32)
    out3 = jax.block_until_ready(decoder_forward(x3, packed, tile_b=1024))
    assert out3.shape == (N3, OUT_DIM)
    assert jnp.allclose(out3, decoder_reference_folded(x3, packed), atol=1e-3), \
        "mismatch vs folded bf16 reference (multi-tile ragged)"

    print("KERNEL_OK")
</pallas_src>

<mosaic_0001>
module attributes {stable_mosaic.version = 11 : i64} {
  func.func @decoder_kernel(%arg0: i32, %arg1: memref<128x96xf32, #tpu.memory_space<vmem>>, %arg2: memref<160x32xbf16, #tpu.memory_space<vmem>>, %arg3: memref<1x32xf32, #tpu.memory_space<vmem>>, %arg4: memref<1x32xf32, #tpu.memory_space<vmem>>, %arg5: memref<1x1xf32, #tpu.memory_space<vmem>>, %arg6: memref<1x128xf32, #tpu.memory_space<vmem>>) attributes {dimension_semantics = [#tpu.dimension_semantics<parallel>], iteration_bounds = array<i64: 1>, scalar_prefetch = 0 : i64, scratch_operands = 0 : i64, tpu.core_type = #tpu.core_type<tc>, window_params = [{transform_indices = @transform_0, window_bounds = array<i64: 128, 96>}, {pipeline_mode = #tpu.pipeline_mode<synchronous>, transform_indices = @transform_1, window_bounds = array<i64: 160, 32>}, {pipeline_mode = #tpu.pipeline_mode<synchronous>, transform_indices = @transform_2, window_bounds = array<i64: 1, 32>}, {pipeline_mode = #tpu.pipeline_mode<synchronous>, transform_indices = @transform_3, window_bounds = array<i64: 1, 32>}, {pipeline_mode = #tpu.pipeline_mode<synchronous>, transform_indices = @transform_4, window_bounds = array<i64: 1, 1>}, {transform_indices = @transform_5, window_bounds = array<i64: 1, 128>}]} {
    %c0 = arith.constant 0 : index
    %c0_0 = arith.constant 0 : index
    %0 = vector.load %arg1[%c0, %c0_0] : memref<128x96xf32, #tpu.memory_space<vmem>>, vector<128x96xf32>
    %1 = arith.truncf %0 : vector<128x96xf32> to vector<128x96xbf16>
    %c0_1 = arith.constant 0 : index
    %c0_2 = arith.constant 0 : index
    %2 = vector.load %arg2[%c0_1, %c0_2] : memref<160x32xbf16, #tpu.memory_space<vmem>>, vector<96x32xbf16>
    %c96 = arith.constant 96 : index
    %c0_3 = arith.constant 0 : index
    %3 = vector.load %arg2[%c96, %c0_3] : memref<160x32xbf16, #tpu.memory_space<vmem>>, vector<32x32xbf16>
    %c128 = arith.constant 128 : index
    %c0_4 = arith.constant 0 : index
    %4 = vector.load %arg2[%c128, %c0_4] : memref<160x32xbf16, #tpu.memory_space<vmem>>, vector<32x1xbf16>
    %cst = arith.constant dense<0.000000e+00> : vector<128x32xf32>
    %5 = tpu.matmul %1, %2, %cst {dimension_numbers = #tpu.dot_dimension_numbers<[1], [0], [0], [1], [0, 0, 1, 1], [], []>} : vector<128x96xbf16>, vector<96x32xbf16>, vector<128x32xf32> -> vector<128x32xf32>
    %c0_5 = arith.constant 0 : index
    %c0_6 = arith.constant 0 : index
    %6 = vector.load %arg3[%c0_5, %c0_6] : memref<1x32xf32, #tpu.memory_space<vmem>>, vector<1x32xf32>
    %7 = vector.broadcast %6 : vector<1x32xf32> to vector<128x32xf32>
    %8 = arith.addf %5, %7 : vector<128x32xf32>
    %cst_7 = arith.constant 0.000000e+00 : f32
    %9 = vector.broadcast %cst_7 : f32 to vector<128x32xf32>
    %10 = arith.maximumf %8, %9 : vector<128x32xf32>
    %11 = arith.truncf %10 : vector<128x32xf32> to vector<128x32xbf16>
    %cst_8 = arith.constant dense<0.000000e+00> : vector<128x32xf32>
    %12 = tpu.matmul %11, %3, %cst_8 {dimension_numbers = #tpu.dot_dimension_numbers<[1], [0], [0], [1], [0, 0, 1, 1], [], []>} : vector<128x32xbf16>, vector<32x32xbf16>, vector<128x32xf32> -> vector<128x32xf32>
    %c0_9 = arith.constant 0 : index
    %c0_10 = arith.constant 0 : index
    %13 = vector.load %arg4[%c0_9, %c0_10] : memref<1x32xf32, #tpu.memory_space<vmem>>, vector<1x32xf32>
    %14 = vector.broadcast %13 : vector<1x32xf32> to vector<128x32xf32>
    %15 = arith.addf %12, %14 : vector<128x32xf32>
    %cst_11 = arith.constant 0.000000e+00 : f32
    %16 = vector.broadcast %cst_11 : f32 to vector<128x32xf32>
    %17 = arith.maximumf %15, %16 : vector<128x32xf32>
    %18 = arith.truncf %17 : vector<128x32xf32> to vector<128x32xbf16>
    %cst_12 = arith.constant dense<0.000000e+00> : vector<128x1xf32>
    %19 = tpu.matmul %18, %4, %cst_12 {dimension_numbers = #tpu.dot_dimension_numbers<[1], [0], [0], [1], [0, 0, 1, 1], [], []>} : vector<128x32xbf16>, vector<32x1xbf16>, vector<128x1xf32> -> vector<128x1xf32>
    %20 = vector.shape_cast %19 : vector<128x1xf32> to vector<1x128xf32>
    %c0_13 = arith.constant 0 : index
    %c0_14 = arith.constant 0 : index
    %21 = vector.load %arg5[%c0_13, %c0_14] : memref<1x1xf32, #tpu.memory_space<vmem>>, vector<1x1xf32>
    %22 = vector.broadcast %21 : vector<1x1xf32> to vector<1x128xf32>
    %23 = arith.addf %20, %22 : vector<1x128xf32>
    %24 = arith.negf %23 : vector<1x128xf32>
    %25 = math.exp %24 : vector<1x128xf32>
    %cst_15 = arith.constant 1.000000e+00 : f32
    %26 = vector.broadcast %cst_15 : f32 to vector<1x128xf32>
    %27 = arith.addf %26, %25 : vector<1x128xf32>
    %28 = arith.divf %26, %27 : vector<1x128xf32>
    %c0_16 = arith.constant 0 : index
    %c0_17 = arith.constant 0 : index
    %29 = vector.load %arg6[%c0_16, %c0_17] : memref<1x128xf32, #tpu.memory_space<vmem>>, vector<1x128xf32>
    tpu.vector_store %arg6[%c0_16, %c0_17], %28 {strides = array<i32>} : memref<1x128xf32, #tpu.memory_space<vmem>>, vector<1x128xf32>,
    return
  }
  func.func @transform_0(%arg0: i32) -> (i32, i32) {
    %c0_i32 = arith.constant 0 : i32
    %c0_i32_0 = arith.constant 0 : i32
    return %arg0, %c0_i32 : i32, i32
  }
  func.func @transform_1(%arg0: i32) -> (i32, i32) {
    %c0_i32 = arith.constant 0 : i32
    %c0_i32_0 = arith.constant 0 : i32
    %c0_i32_1 = arith.constant 0 : i32
    return %c0_i32, %c0_i32_0 : i32, i32
  }
  func.func @transform_2(%arg0: i32) -> (i32, i32) {
    %c0_i32 = arith.constant 0 : i32
    %c0_i32_0 = arith.constant 0 : i32
    %c0_i32_1 = arith.constant 0 : i32
    return %c0_i32, %c0_i32_0 : i32, i32
  }
  func.func @transform_3(%arg0: i32) -> (i32, i32) {
    %c0_i32 = arith.constant 0 : i32
    %c0_i32_0 = arith.constant 0 : i32
    %c0_i32_1 = arith.constant 0 : i32
    return %c0_i32, %c0_i32_0 : i32, i32
  }
  func.func @transform_4(%arg0: i32) -> (i32, i32) {
    %c0_i32 = arith.constant 0 : i32
    %c0_i32_0 = arith.constant 0 : i32
    %c0_i32_1 = arith.constant 0 : i32
    return %c0_i32, %c0_i32_0 : i32, i32
  }
  func.func @transform_5(%arg0: i32) -> (i32, i32) {
    %c0_i32 = arith.constant 0 : i32
    %c0_i32_0 = arith.constant 0 : i32
    return %arg0, %c0_i32 : i32, i32
  }
}

module attributes {stable_mosaic.version = 11 : i64} {
  func.func @decoder_kernel(%arg0: i32, %arg1: memref<128x96xf32, #tpu.memory_space<vmem>>, %arg2: memref<160x32xbf16, #tpu.memory_space<vmem>>, %arg3: memref<1x32xf32, #tpu.memory_space<vmem>>, %arg4: memref<1x32xf32, #tpu.memory_space<vmem>>, %arg5: memref<1x1xf32, #tpu.memory_space<vmem>>, %arg6: memref<128x1xf32, #tpu.memory_space<vmem>>) attributes {dimension_semantics = [#tpu.dimension_semantics<parallel>], iteration_bounds = array<i64: 1>, scalar_prefetch = 0 : i64, scratch_operands = 0 : i64, tpu.core_type = #tpu.core_type<tc>, window_params = [{transform_indices = @transform_0, window_bounds = array<i64: 128, 96>}, {pipeline_mode = #tpu.pipeline_mode<synchronous>, transform_indices = @transform_1, window_bounds = array<i64: 160, 32>}, {pipeline_mode = #tpu.pipeline_mode<synchronous>, transform_indices = @transform_2, window_bounds = array<i64: 1, 32>}, {pipeline_mode = #tpu.pipeline_mode<synchronous>, transform_indices = @transform_3, window_bounds = array<i64: 1, 32>}, {pipeline_mode = #tpu.pipeline_mode<synchronous>, transform_indices = @transform_4, window_bounds = array<i64: 1, 1>}, {transform_indices = @transform_5, window_bounds = array<i64: 128, 1>}]} {
    %c0 = arith.constant 0 : index
    %c0_0 = arith.constant 0 : index
    %0 = vector.load %arg1[%c0, %c0_0] : memref<128x96xf32, #tpu.memory_space<vmem>>, vector<128x96xf32>
    %1 = arith.truncf %0 : vector<128x96xf32> to vector<128x96xbf16>
    %c0_1 = arith.constant 0 : index
    %c0_2 = arith.constant 0 : index
    %2 = vector.load %arg2[%c0_1, %c0_2] : memref<160x32xbf16, #tpu.memory_space<vmem>>, vector<96x32xbf16>
    %c96 = arith.constant 96 : index
    %c0_3 = arith.constant 0 : index
    %3 = vector.load %arg2[%c96, %c0_3] : memref<160x32xbf16, #tpu.memory_space<vmem>>, vector<32x32xbf16>
    %c128 = arith.constant 128 : index
    %c0_4 = arith.constant 0 : index
    %4 = vector.load %arg2[%c128, %c0_4] : memref<160x32xbf16, #tpu.memory_space<vmem>>, vector<32x1xbf16>
    %cst = arith.constant dense<0.000000e+00> : vector<128x32xf32>
    %5 = tpu.matmul %1, %2, %cst {dimension_numbers = #tpu.dot_dimension_numbers<[1], [0], [0], [1], [0, 0, 1, 1], [], []>} : vector<128x96xbf16>, vector<96x32xbf16>, vector<128x32xf32> -> vector<128x32xf32>
    %c0_5 = arith.constant 0 : index
    %c0_6 = arith.constant 0 : index
    %6 = vector.load %arg3[%c0_5, %c0_6] : memref<1x32xf32, #tpu.memory_space<vmem>>, vector<1x32xf32>
    %7 = vector.broadcast %6 : vector<1x32xf32> to vector<128x32xf32>
    %8 = arith.addf %5, %7 : vector<128x32xf32>
    %cst_7 = arith.constant 0.000000e+00 : f32
    %9 = vector.broadcast %cst_7 : f32 to vector<128x32xf32>
    %10 = arith.maximumf %8, %9 : vector<128x32xf32>
    %11 = arith.truncf %10 : vector<128x32xf32> to vector<128x32xbf16>
    %cst_8 = arith.constant dense<0.000000e+00> : vector<128x32xf32>
    %12 = tpu.matmul %11, %3, %cst_8 {dimension_numbers = #tpu.dot_dimension_numbers<[1], [0], [0], [1], [0, 0, 1, 1], [], []>} : vector<128x32xbf16>, vector<32x32xbf16>, vector<128x32xf32> -> vector<128x32xf32>
    %c0_9 = arith.constant 0 : index
    %c0_10 = arith.constant 0 : index
    %13 = vector.load %arg4[%c0_9, %c0_10] : memref<1x32xf32, #tpu.memory_space<vmem>>, vector<1x32xf32>
    %14 = vector.broadcast %13 : vector<1x32xf32> to vector<128x32xf32>
    %15 = arith.addf %12, %14 : vector<128x32xf32>
    %cst_11 = arith.constant 0.000000e+00 : f32
    %16 = vector.broadcast %cst_11 : f32 to vector<128x32xf32>
    %17 = arith.maximumf %15, %16 : vector<128x32xf32>
    %18 = arith.truncf %17 : vector<128x32xf32> to vector<128x32xbf16>
    %cst_12 = arith.constant dense<0.000000e+00> : vector<128x1xf32>
    %19 = tpu.matmul %18, %4, %cst_12 {dimension_numbers = #tpu.dot_dimension_numbers<[1], [0], [0], [1], [0, 0, 1, 1], [], []>} : vector<128x32xbf16>, vector<32x1xbf16>, vector<128x1xf32> -> vector<128x1xf32>
    %c0_13 = arith.constant 0 : index
    %c0_14 = arith.constant 0 : index
    %20 = vector.load %arg5[%c0_13, %c0_14] : memref<1x1xf32, #tpu.memory_space<vmem>>, vector<1x1xf32>
    %21 = vector.broadcast %20 : vector<1x1xf32> to vector<128x1xf32>
    %22 = arith.addf %19, %21 : vector<128x1xf32>
    %23 = arith.negf %22 : vector<128x1xf32>
    %24 = math.exp %23 : vector<128x1xf32>
    %cst_15 = arith.constant 1.000000e+00 : f32
    %25 = vector.broadcast %cst_15 : f32 to vector<128x1xf32>
    %26 = arith.addf %25, %24 : vector<128x1xf32>
    %27 = arith.divf %25, %26 : vector<128x1xf32>
    %c0_16 = arith.constant 0 : index
    %c0_17 = arith.constant 0 : index
    %28 = vector.load %arg6[%c0_16, %c0_17] : memref<128x1xf32, #tpu.memory_space<vmem>>, vector<128x1xf32>
    tpu.vector_store %arg6[%c0_16, %c0_17], %27 {strides = array<i32>} : memref<128x1xf32, #tpu.memory_space<vmem>>, vector<128x1xf32>,
    return
  }
  func.func @transform_0(%arg0: i32) -> (i32, i32) {
    %c0_i32 = arith.constant 0 : i32
    %c0_i32_0 = arith.constant 0 : i32
    return %arg0, %c0_i32 : i32, i32
  }
  func.func @transform_1(%arg0: i32) -> (i32, i32) {
    %c0_i32 = arith.constant 0 : i32
    %c0_i32_0 = arith.constant 0 : i32
    %c0_i32_1 = arith.constant 0 : i32
    return %c0_i32, %c0_i32_0 : i32, i32
  }
  func.func @transform_2(%arg0: i32) -> (i32, i32) {
    %c0_i32 = arith.constant 0 : i32
    %c0_i32_0 = arith.constant 0 : i32
    %c0_i32_1 = arith.constant 0 : i32
    return %c0_i32, %c0_i32_0 : i32, i32
  }
  func.func @transform_3(%arg0: i32) -> (i32, i32) {
    %c0_i32 = arith.constant 0 : i32
    %c0_i32_0 = arith.constant 0 : i32
    %c0_i32_1 = arith.constant 0 : i32
    return %c0_i32, %c0_i32_0 : i32, i32
  }
  func.func @transform_4(%arg0: i32) -> (i32, i32) {
    %c0_i32 = arith.constant 0 : i32
    %c0_i32_0 = arith.constant 0 : i32
    %c0_i32_1 = arith.constant 0 : i32
    return %c0_i32, %c0_i32_0 : i32, i32
  }
  func.func @transform_5(%arg0: i32) -> (i32, i32) {
    %c0_i32 = arith.constant 0 : i32
    %c0_i32_0 = arith.constant 0 : i32
    return %arg0, %c0_i32 : i32, i32
  }
}

</mosaic_0001>

<llo_original>
// kernel: tpu_custom_call.1
$region0: #{tpu_custom_call.1}
  #allocation0 [shape = 'u32[]', space=smem, size = 0x4, offset = 0x4, fixed_abs, tag = 'smem constant byte address 0x4 - core index']
  #allocation1 [shape = 'u32[144,128]{1,0:T(1,128)}', space=vmem, size = 0x12000, scoped, tag = 'internal scratch']
  #allocation2 [shape = 'f32[1,1]{1,0:T(1,128)S(1)}', space=vmem, size = 0x200, scoped, tag = 'scoped memory for tpu_custom_call.1']
  %s0 = inlined_call_operand.vmem [shape: f32[16,96], index: 0, kind: input, shape index: {}]
  %s1 = inlined_call_operand.vmem [shape: bf16[160,32], index: 1, kind: input, shape index: {}]
  %s2 = inlined_call_operand.vmem [shape: f32[1,32], index: 2, kind: input, shape index: {}]
  %s3 = inlined_call_operand.vmem [shape: f32[1,32], index: 3, kind: input, shape index: {}]
  %s4 = inlined_call_operand.<no memory space> [shape: f32[1,1], index: 4, kind: input, shape index: {}]
  %s5 = inlined_call_operand.hbm [shape: f32[1,128], index: 5, kind: output, shape index: {}]
  %s6 = sld [smem:[#allocation0]]
  $region30: #{tpu_custom_call.1} parent=0
    _
  %s8 = ssub.s32 1, %s6
  %s9 = scalar_select 0, %s8, %s6
  %v10 = vstv %s4
  %11 = vst [vmem:[#allocation2] sm:$0x1] %v10
  $region1: #{tpu_custom_call.1} parent=0
    #allocation3 [shape = 'u8[512]{0}', space=vmem, size = 0x400, scoped, tag = 'output window, operand 0, single buffered']
    #allocation4 [shape = 's32[1]{0}', space=sflag, size = 0x4, scoped, tag = 'scoped memory for tpu_custom_call.1']
    %12 = vsyncpa [#allocation4], 0
    // Predicated region
    $region2: #{tpu_custom_call.1} parent=1 // pred_check
      _
    $region3: #{tpu_custom_call.1} parent=1 // pred_check_branch
      %14 = sbr.rel (0) target = $region5
    $region4: #{tpu_custom_call.1} parent=1 // pred_region
      _
    $region5: #{tpu_custom_call.1} parent=1 // pred_fallthru
      _
    // Predicated region
    $region6: #{tpu_custom_call.1} parent=1 // pred_check
      _
    $region7: #{tpu_custom_call.1} parent=1 // pred_check_branch
      %16 = sbr.rel (0) target = $region9
    $region8: #{tpu_custom_call.1} parent=1 // pred_region
      _
    $region9: #{tpu_custom_call.1} parent=1 // pred_fallthru
      _
    // Predicated region
    $region10: #{tpu_custom_call.1} parent=1 // pred_check
      _
    $region11: #{tpu_custom_call.1} parent=1 // pred_check_branch
      %18 = sbr.rel (0) target = $region13
    $region12: #{tpu_custom_call.1} parent=1 // pred_region
      _
    $region13: #{tpu_custom_call.1} parent=1 // pred_fallthru
      _
    // Predicated region
    $region14: #{tpu_custom_call.1} parent=1 // pred_check
      _
    $region15: #{tpu_custom_call.1} parent=1 // pred_check_branch
      %20 = sbr.rel (0) target = $region17
    $region16: #{tpu_custom_call.1} parent=1 // pred_region
      _
    $region17: #{tpu_custom_call.1} parent=1 // pred_fallthru
      _
    // Predicated region
    $region18: #{tpu_custom_call.1} parent=1 // pred_check
      _
    $region19: #{tpu_custom_call.1} parent=1 // pred_check_branch
      %22 = sbr.rel (0) target = $region21
    $region20: #{tpu_custom_call.1} parent=1 // pred_region
      _
    $region21: #{tpu_custom_call.1} parent=1 // pred_fallthru
      _
    %v24 = vld [vmem:[%s0] sm:$0xff]
    %v25 = vld [vmem:[%s0 + $0x8] sm:$0xff]
    %v26 = vld [vmem:[%s0 + $0x10] sm:$0xff]
    %v27 = vld [vmem:[%s0 + $0x18] sm:$0xff]
    %v28 = vld [vmem:[%s0 + $0x20] sm:$0xff]
    %v29 = vld [vmem:[%s0 + $0x28] sm:$0xff]
    %v30 = vld [vmem:[%s0 + $0x30] sm:$0xff]
    %v31 = vld [vmem:[%s0 + $0x38] sm:$0xff]
    %v32 = vld [vmem:[%s0 + $0x40] sm:$0xff]
    %v33 = vld [vmem:[%s0 + $0x48] sm:$0xff]
    %v34 = vld [vmem:[%s0 + $0x50] sm:$0xff]
    %v35 = vld [vmem:[%s0 + $0x58] sm:$0xff]
    %v36 = vld [vmem:[%s0 + $0x60] sm:$0xff]
    %v37 = vld [vmem:[%s0 + $0x68] sm:$0xff]
    %v38 = vld [vmem:[%s0 + $0x70] sm:$0xff]
    %v39 = vld [vmem:[%s0 + $0x78] sm:$0xff]
    %v40 = vpack.c.bf16 %v25, %v24
    %v41 = vpack.c.bf16 %v27, %v26
    %v42 = vpack.c.bf16 %v29, %v28
    %v43 = vpack.c.bf16 %v31, %v30
    %v44 = vpack.c.bf16 %v33, %v32
    %v45 = vpack.c.bf16 %v35, %v34
    %v46 = vpack.c.bf16 %v37, %v36
    %v47 = vpack.c.bf16 %v39, %v38
    %v48 = vld [vmem:[%s1] sm:$0xf]
    %v49 = vld [vmem:[%s1 + $0x4] sm:$0xf]
    %v50 = vld [vmem:[%s1 + $0x8] sm:$0xf]
    %v51 = vld [vmem:[%s1 + $0xc] sm:$0xf]
    %v52 = vld [vmem:[%s1 + $0x10] sm:$0xf]
    %v53 = vld [vmem:[%s1 + $0x14] sm:$0xf]
    %v54 = vld [vmem:[%s1 + $0x18] sm:$0xf]
    %v55 = vld [vmem:[%s1 + $0x1c] sm:$0xf]
    %v56 = vld [vmem:[%s1 + $0x20] sm:$0xf]
    %v57 = vld [vmem:[%s1 + $0x24] sm:$0xf]
    %v58 = vld [vmem:[%s1 + $0x28] sm:$0xf]
    %v59 = vld [vmem:[%s1 + $0x2c] sm:$0xf]
    %v60 = vld [vmem:[%s1 + $0x30] sm:$0xf]
    %v61 = vld [vmem:[%s1 + $0x34] sm:$0xf]
    %v62 = vld [vmem:[%s1 + $0x38] sm:$0xf]
    %v63 = vld [vmem:[%s1 + $0x3c] sm:$0xf]
    %v64 = vld [vmem:[%s1 + $0x40] sm:$0xf]
    %v65 = vld [vmem:[%s1 + $0x44] sm:$0xf]
    %v66 = vld [vmem:[%s1 + $0x48] sm:$0xf]
    %v67 = vld [vmem:[%s1 + $0x4c] sm:$0xf]
    %v68 = vld [vmem:[%s2] sm:$0x1]
    %v70 = vlaneseq
    %v71 = vshrl.u32 %v70, 7
    %v72 = vsub.s32 0, %v71
    %v73 = vrot.slane %v68, %v72
    %v87 = vunpack.c.l.b16 %v48
    %v88 = vunpack.c.l.b16 %v49
    %v89 = vunpack.c.l.b16 %v50
    %v90 = vunpack.c.l.b16 %v51
    %v91 = vunpack.c.l.b16 %v52
    %v92 = vunpack.c.l.b16 %v53
    %v93 = vunpack.c.l.b16 %v54
    %v94 = vunpack.c.l.b16 %v55
    %v95 = vunpack.c.l.b16 %v56
    %v96 = vunpack.c.l.b16 %v57
    %v97 = vunpack.c.l.b16 %v58
    %v98 = vunpack.c.l.b16 %v59
    %v99 = vpack.c.b16 %v88, %v87
    %v100 = vpack.c.b16 %v90, %v89
    %v101 = vpack.c.b16 %v92, %v91
    %v102 = vpack.c.b16 %v94, %v93
    %v103 = vpack.c.b16 %v96, %v95
    %v104 = vpack.c.b16 %v98, %v97
    %vm111 = vcmask 785408
    %v113 = vsel %vm111, %v40, 0
    %v116 = vsel %vm111, %v41, 0
    %v119 = vsel %vm111, %v42, 0
    %v122 = vsel %vm111, %v43, 0
    %v125 = vsel %vm111, %v44, 0
    %v128 = vsel %vm111, %v45, 0
    %v131 = vsel %vm111, %v46, 0
    %v134 = vsel %vm111, %v47, 0
    %136 = vmatprep.subr.bf16.mxu0 0
    %137 = vmatpush1.bf16.msra.mxu0 %v99
    %138 = vmatprep.subr.bf16.mxu0 0
    %139 = vmatpush1.bf16.msra.mxu0 %v100
    %140 = vmatprep.subr.bf16.mxu0 0
    %141 = vmatpush1.bf16.msra.mxu0 %v101
    %142 = vmatprep.subr.bf16.mxu0 0
    %143 = vmatpush1.bf16.msra.mxu0 %v102
    %144 = vmatprep.subr.bf16.mxu0 0
    %145 = vmatpush1.bf16.msra.mxu0 %v103
    %146 = vmatprep.subr.bf16.mxu0 0
    %147 = vmatpush1.bf16.msra.mxu0 %v104
    %148 = vmatprep.subr.bf16.mxu0 0
    %149 = vmatpush1.bf16.msra.mxu0 0
    %150 = vmatprep.subr.bf16.mxu0 0
    %151 = vmatpush1.bf16.msra.mxu0 0
    %152 = vmatprep.subr.bf16.mxu0 0
    %153 = vmatpush1.bf16.msra.mxu0 0
    %154 = vmatprep.subr.bf16.mxu0 0
    %155 = vmatpush1.bf16.msra.mxu0 0
    %156 = vmatprep.subr.bf16.mxu0 0
    %157 = vmatpush1.bf16.msra.mxu0 0
    %158 = vmatprep.subr.bf16.mxu0 0
    %159 = vmatpush1.bf16.msra.mxu0 0
    %160 = vmatprep.subr.bf16.mxu0 0
    %161 = vmatpush1.bf16.msra.mxu0 0
    %162 = vmatprep.subr.bf16.mxu0 0
    %163 = vmatpush1.bf16.msra.mxu0 0
    %164 = vmatprep.subr.bf16.mxu0 0
    %165 = vmatpush1.bf16.msra.mxu0 0
    %166 = vmatprep.subr.bf16.mxu0 0
    %167 = vmatpush1.bf16.msra.mxu0 0
    %168 = vmatprep.mubr.bf16.mxu0 0
    %169 = vmatmul.mubr.bf16.gmra.mrb[0].mxu0 %v113
    %v170 = vpop.f32.mrb[0].mxu0
    %v171 = vadd.f32 %v73, %v170
    %v172 = vpop.f32.mrb[0].mxu0
    %v173 = vpop.f32.mrb[0].mxu0
    %v174 = vadd.f32 %v73, %v173
    %v175 = vpop.f32.mrb[0].mxu0
    %176 = vmatprep.mubr.bf16.mxu0 0
    %177 = vmatmul.mubr.bf16.gmra.mrb[0].mxu0 %v116
    %v178 = vpop.f32.mrb[0].mxu0
    %v179 = vadd.f32 %v73, %v178
    %v180 = vpop.f32.mrb[0].mxu0
    %v181 = vpop.f32.mrb[0].mxu0
    %v182 = vadd.f32 %v73, %v181
    %v183 = vpop.f32.mrb[0].mxu0
    %184 = vmatprep.mubr.bf16.mxu0 0
    %185 = vmatmul.mubr.bf16.gmra.mrb[0].mxu0 %v119
    %v186 = vpop.f32.mrb[0].mxu0
    %v187 = vadd.f32 %v73, %v186
    %v188 = vpop.f32.mrb[0].mxu0
    %v189 = vpop.f32.mrb[0].mxu0
    %v190 = vadd.f32 %v73, %v189
    %v191 = vpop.f32.mrb[0].mxu0
    %192 = vmatprep.mubr.bf16.mxu0 0
    %193 = vmatmul.mubr.bf16.gmra.mrb[0].mxu0 %v122
    %v194 = vpop.f32.mrb[0].mxu0
    %v195 = vadd.f32 %v73, %v194
    %v196 = vpop.f32.mrb[0].mxu0
    %v197 = vpop.f32.mrb[0].mxu0
    %v198 = vadd.f32 %v73, %v197
    %v199 = vpop.f32.mrb[0].mxu0
    %200 = vmatprep.mubr.bf16.mxu0 0
    %201 = vmatmul.mubr.bf16.gmra.mrb[0].mxu0 %v125
    %v202 = vpop.f32.mrb[0].mxu0
    %v203 = vadd.f32 %v73, %v202
    %v204 = vpop.f32.mrb[0].mxu0
    %v205 = vpop.f32.mrb[0].mxu0
    %v206 = vadd.f32 %v73, %v205
    %v207 = vpop.f32.mrb[0].mxu0
    %208 = vmatprep.mubr.bf16.mxu0 0
    %209 = vmatmul.mubr.bf16.gmra.mrb[0].mxu0 %v128
    %v210 = vpop.f32.mrb[0].mxu0
    %v211 = vadd.f32 %v73, %v210
    %v212 = vpop.f32.mrb[0].mxu0
    %v213 = vpop.f32.mrb[0].mxu0
    %v214 = vadd.f32 %v73, %v213
    %v215 = vpop.f32.mrb[0].mxu0
    %216 = vmatprep.mubr.bf16.mxu0 0
    %217 = vmatmul.mubr.bf16.gmra.mrb[0].mxu0 %v131
    %v218 = vpop.f32.mrb[0].mxu0
    %v219 = vadd.f32 %v73, %v218
    %v220 = vpop.f32.mrb[0].mxu0
    %v221 = vpop.f32.mrb[0].mxu0
    %v222 = vadd.f32 %v73, %v221
    %v223 = vpop.f32.mrb[0].mxu0
    %224 = vmatprep.mubr.bf16.mxu0 0
    %225 = vmatmul.mubr.bf16.gmra.mrb[0].mxu0 %v134
    %v226 = vpop.f32.mrb[0].mxu0
    %v227 = vadd.f32 %v73, %v226
    %v228 = vpop.f32.mrb[0].mxu0
    %v229 = vpop.f32.mrb[0].mxu0
    %v230 = vadd.f32 %v73, %v229
    %v231 = vpop.f32.mrb[0].mxu0
    %232 = vdwg.mxu0
    %v233 = vmax.f32 %v171, 0.0
    %v234 = vmax.f32 %v174, 0.0
    %v235 = vmax.f32 %v179, 0.0
    %v236 = vmax.f32 %v182, 0.0
    %v237 = vmax.f32 %v187, 0.0
    %v238 = vmax.f32 %v190, 0.0
    %v239 = vmax.f32 %v195, 0.0
    %v240 = vmax.f32 %v198, 0.0
    %v241 = vmax.f32 %v203, 0.0
    %v242 = vmax.f32 %v206, 0.0
    %v243 = vmax.f32 %v211, 0.0
    %v244 = vmax.f32 %v214, 0.0
    %v245 = vmax.f32 %v219, 0.0
    %v246 = vmax.f32 %v222, 0.0
    %v247 = vmax.f32 %v227, 0.0
    %v248 = vmax.f32 %v230, 0.0
    %v249 = vpack.c.bf16 %v234, %v233
    %v250 = vpack.c.bf16 %v236, %v235
    %v251 = vpack.c.bf16 %v238, %v237
    %v252 = vpack.c.bf16 %v240, %v239
    %v253 = vpack.c.bf16 %v242, %v241
    %v254 = vpack.c.bf16 %v244, %v243
    %v255 = vpack.c.bf16 %v246, %v245
    %v256 = vpack.c.bf16 %v248, %v247
    %v257 = vld [vmem:[%s3] sm:$0x1]
    %v259 = vlaneseq
    %v260 = vshrl.u32 %v259, 7
    %v261 = vsub.s32 0, %v260
    %v262 = vrot.slane %v257, %v261
    %v268 = vunpack.c.l.b16 %v60
    %v269 = vunpack.c.l.b16 %v61
    %v270 = vunpack.c.l.b16 %v62
    %v271 = vunpack.c.l.b16 %v63
    %v272 = vpack.c.b16 %v269, %v268
    %v273 = vpack.c.b16 %v271, %v270
    %vm276 = vcmask 261120
    %v278 = vsel %vm276, %v249, 0
    %v281 = vsel %vm276, %v250, 0
    %v284 = vsel %vm276, %v251, 0
    %v287 = vsel %vm276, %v252, 0
    %v290 = vsel %vm276, %v253, 0
    %v293 = vsel %vm276, %v254, 0
    %v296 = vsel %vm276, %v255, 0
    %v299 = vsel %vm276, %v256, 0
    %301 = vmatprep.subr.bf16.mxu0 0
    %302 = vmatpush1.bf16.msra.mxu0 %v272
    %303 = vmatprep.subr.bf16.mxu0 0
    %304 = vmatpush1.bf16.msra.mxu0 %v273
    %305 = vmatprep.subr.bf16.mxu0 0
    %306 = vmatpush1.bf16.msra.mxu0 0
    %307 = vmatprep.subr.bf16.mxu0 0
    %308 = vmatpush1.bf16.msra.mxu0 0
    %309 = vmatprep.subr.bf16.mxu0 0
    %310 = vmatpush1.bf16.msra.mxu0 0
    %311 = vmatprep.subr.bf16.mxu0 0
    %312 = vmatpush1.bf16.msra.mxu0 0
    %313 = vmatprep.subr.bf16.mxu0 0
    %314 = vmatpush1.bf16.msra.mxu0 0
    %315 = vmatprep.subr.bf16.mxu0 0
    %316 = vmatpush1.bf16.msra.mxu0 0
    %317 = vmatprep.subr.bf16.mxu0 0
    %318 = vmatpush1.bf16.msra.mxu0 0
    %319 = vmatprep.subr.bf16.mxu0 0
    %320 = vmatpush1.bf16.msra.mxu0 0
    %321 = vmatprep.subr.bf16.mxu0 0
    %322 = vmatpush1.bf16.msra.mxu0 0
    %323 = vmatprep.subr.bf16.mxu0 0
    %324 = vmatpush1.bf16.msra.mxu0 0
    %325 = vmatprep.subr.bf16.mxu0 0
    %326 = vmatpush1.bf16.msra.mxu0 0
    %327 = vmatprep.subr.bf16.mxu0 0
    %328 = vmatpush1.bf16.msra.mxu0 0
    %329 = vmatprep.subr.bf16.mxu0 0
    %330 = vmatpush1.bf16.msra.mxu0 0
    %331 = vmatprep.subr.bf16.mxu0 0
    %332 = vmatpush1.bf16.msra.mxu0 0
    %333 = vmatprep.mubr.bf16.mxu0 0
    %334 = vmatmul.mubr.bf16.gmra.mrb[0].mxu0 %v278
    %v335 = vpop.f32.mrb[0].mxu0
    %v336 = vadd.f32 %v262, %v335
    %v337 = vpop.f32.mrb[0].mxu0
    %v338 = vpop.f32.mrb[0].mxu0
    %v339 = vadd.f32 %v262, %v338
    %v340 = vpop.f32.mrb[0].mxu0
    %341 = vmatprep.mubr.bf16.mxu0 0
    %342 = vmatmul.mubr.bf16.gmra.mrb[0].mxu0 %v281
    %v343 = vpop.f32.mrb[0].mxu0
    %v344 = vadd.f32 %v262, %v343
    %v345 = vpop.f32.mrb[0].mxu0
    %v346 = vpop.f32.mrb[0].mxu0
    %v347 = vadd.f32 %v262, %v346
    %v348 = vpop.f32.mrb[0].mxu0
    %349 = vmatprep.mubr.bf16.mxu0 0
    %350 = vmatmul.mubr.bf16.gmra.mrb[0].mxu0 %v284
    %v351 = vpop.f32.mrb[0].mxu0
    %v352 = vadd.f32 %v262, %v351
    %v353 = vpop.f32.mrb[0].mxu0
    %v354 = vpop.f32.mrb[0].mxu0
    %v355 = vadd.f32 %v262, %v354
    %v356 = vpop.f32.mrb[0].mxu0
    %357 = vmatprep.mubr.bf16.mxu0 0
    %358 = vmatmul.mubr.bf16.gmra.mrb[0].mxu0 %v287
    %v359 = vpop.f32.mrb[0].mxu0
    %v360 = vadd.f32 %v262, %v359
    %v361 = vpop.f32.mrb[0].mxu0
    %v362 = vpop.f32.mrb[0].mxu0
    %v363 = vadd.f32 %v262, %v362
    %v364 = vpop.f32.mrb[0].mxu0
    %365 = vmatprep.mubr.bf16.mxu0 0
    %366 = vmatmul.mubr.bf16.gmra.mrb[0].mxu0 %v290
    %v367 = vpop.f32.mrb[0].mxu0
    %v368 = vadd.f32 %v262, %v367
    %v369 = vpop.f32.mrb[0].mxu0
    %v370 = vpop.f32.mrb[0].mxu0
    %v371 = vadd.f32 %v262, %v370
    %v372 = vpop.f32.mrb[0].mxu0
    %373 = vmatprep.mubr.bf16.mxu0 0
    %374 = vmatmul.mubr.bf16.gmra.mrb[0].mxu0 %v293
    %v375 = vpop.f32.mrb[0].mxu0
    %v376 = vadd.f32 %v262, %v375
    %v377 = vpop.f32.mrb[0].mxu0
    %v378 = vpop.f32.mrb[0].mxu0
    %v379 = vadd.f32 %v262, %v378
    %v380 = vpop.f32.mrb[0].mxu0
    %381 = vmatprep.mubr.bf16.mxu0 0
    %382 = vmatmul.mubr.bf16.gmra.mrb[0].mxu0 %v296
    %v383 = vpop.f32.mrb[0].mxu0
    %v384 = vadd.f32 %v262, %v383
    %v385 = vpop.f32.mrb[0].mxu0
    %v386 = vpop.f32.mrb[0].mxu0
    %v387 = vadd.f32 %v262, %v386
    %v388 = vpop.f32.mrb[0].mxu0
    %389 = vmatprep.mubr.bf16.mxu0 0
    %390 = vmatmul.mubr.bf16.gmra.mrb[0].mxu0 %v299
    %v391 = vpop.f32.mrb[0].mxu0
    %v392 = vadd.f32 %v262, %v391
    %v393 = vpop.f32.mrb[0].mxu0
    %v394 = vpop.f32.mrb[0].mxu0
    %v395 = vadd.f32 %v262, %v394
    %v396 = vpop.f32.mrb[0].mxu0
    %397 = vdwg.mxu0
    %v398 = vmax.f32 %v336, 0.0
    %v399 = vmax.f32 %v339, 0.0
    %v400 = vmax.f32 %v344, 0.0
    %v401 = vmax.f32 %v347, 0.0
    %v402 = vmax.f32 %v352, 0.0
    %v403 = vmax.f32 %v355, 0.0
    %v404 = vmax.f32 %v360, 0.0
    %v405 = vmax.f32 %v363, 0.0
    %v406 = vmax.f32 %v368, 0.0
    %v407 = vmax.f32 %v371, 0.0
    %v408 = vmax.f32 %v376, 0.0
    %v409 = vmax.f32 %v379, 0.0
    %v410 = vmax.f32 %v384, 0.0
    %v411 = vmax.f32 %v387, 0.0
    %v412 = vmax.f32 %v392, 0.0
    %v413 = vmax.f32 %v395, 0.0
    %v414 = vpack.c.bf16 %v399, %v398
    %v415 = vpack.c.bf16 %v401, %v400
    %v416 = vpack.c.bf16 %v403, %v402
    %v417 = vpack.c.bf16 %v405, %v404
    %v418 = vpack.c.bf16 %v407, %v406
    %v419 = vpack.c.bf16 %v409, %v408
    %v420 = vpack.c.bf16 %v411, %v410
    %v421 = vpack.c.bf16 %v413, %v412
    %v426 = vunpack.c.l.b16 %v64
    %v427 = vunpack.c.l.b16 %v65
    %v428 = vunpack.c.l.b16 %v66
    %v429 = vunpack.c.l.b16 %v67
    %v430 = vpack.c.b16 %v427, %v426
    %v431 = vpack.c.b16 %v429, %v428
    %v435 = vsel %vm276, %v414, 0
    %v438 = vsel %vm276, %v415, 0
    %v441 = vsel %vm276, %v416, 0
    %v444 = vsel %vm276, %v417, 0
    %v447 = vsel %vm276, %v418, 0
    %v450 = vsel %vm276, %v419, 0
    %v453 = vsel %vm276, %v420, 0
    %v456 = vsel %vm276, %v421, 0
    %458 = vmatprep.subr.bf16.mxu0 0
    %459 = vmatpush1.bf16.msra.mxu0 %v430
    %460 = vmatprep.subr.bf16.mxu0 0
    %461 = vmatpush1.bf16.msra.mxu0 %v431
    %462 = vmatprep.subr.bf16.mxu0 0
    %463 = vmatpush1.bf16.msra.mxu0 0
    %464 = vmatprep.subr.bf16.mxu0 0
    %465 = vmatpush1.bf16.msra.mxu0 0
    %466 = vmatprep.subr.bf16.mxu0 0
    %467 = vmatpush1.bf16.msra.mxu0 0
    %468 = vmatprep.subr.bf16.mxu0 0
    %469 = vmatpush1.bf16.msra.mxu0 0
    %470 = vmatprep.subr.bf16.mxu0 0
    %471 = vmatpush1.bf16.msra.mxu0 0
    %472 = vmatprep.subr.bf16.mxu0 0
    %473 = vmatpush1.bf16.msra.mxu0 0
    %474 = vmatprep.subr.bf16.mxu0 0
    %475 = vmatpush1.bf16.msra.mxu0 0
    %476 = vmatprep.subr.bf16.mxu0 0
    %477 = vmatpush1.bf16.msra.mxu0 0
    %478 = vmatprep.subr.bf16.mxu0 0
    %479 = vmatpush1.bf16.msra.mxu0 0
    %480 = vmatprep.subr.bf16.mxu0 0
    %481 = vmatpush1.bf16.msra.mxu0 0
    %482 = vmatprep.subr.bf16.mxu0 0
    %483 = vmatpush1.bf16.msra.mxu0 0
    %484 = vmatprep.subr.bf16.mxu0 0
    %485 = vmatpush1.bf16.msra.mxu0 0
    %486 = vmatprep.subr.bf16.mxu0 0
    %487 = vmatpush1.bf16.msra.mxu0 0
    %488 = vmatprep.subr.bf16.mxu0 0
    %489 = vmatpush1.bf16.msra.mxu0 0
    %490 = vmatprep.mubr.bf16.mxu0 0
    %491 = vmatmul.mubr.bf16.gmra.mrb[0].mxu0 %v435
    %v492 = vpop.f32.mrb[0].mxu0
    %v493 = vadd.f32 0.0, %v492
    %v494 = vpop.f32.mrb[0].mxu0
    %v495 = vpop.f32.mrb[0].mxu0
    %v496 = vadd.f32 0.0, %v495
    %v497 = vpop.f32.mrb[0].mxu0
    %498 = vmatprep.mubr.bf16.mxu0 0
    %499 = vmatmul.mubr.bf16.gmra.mrb[0].mxu0 %v438
    %v500 = vpop.f32.mrb[0].mxu0
    %v501 = vadd.f32 0.0, %v500
    %v502 = vpop.f32.mrb[0].mxu0
    %v503 = vpop.f32.mrb[0].mxu0
    %v504 = vadd.f32 0.0, %v503
    %v505 = vpop.f32.mrb[0].mxu0
    %506 = vmatprep.mubr.bf16.mxu0 0
    %507 = vmatmul.mubr.bf16.gmra.mrb[0].mxu0 %v441
    %v508 = vpop.f32.mrb[0].mxu0
    %v509 = vadd.f32 0.0, %v508
    %v510 = vpop.f32.mrb[0].mxu0
    %v511 = vpop.f32.mrb[0].mxu0
    %v512 = vadd.f32 0.0, %v511
    %v513 = vpop.f32.mrb[0].mxu0
    %514 = vmatprep.mubr.bf16.mxu0 0
    %515 = vmatmul.mubr.bf16.gmra.mrb[0].mxu0 %v444
    %v516 = vpop.f32.mrb[0].mxu0
    %v517 = vadd.f32 0.0, %v516
    %v518 = vpop.f32.mrb[0].mxu0
    %v519 = vpop.f32.mrb[0].mxu0
    %v520 = vadd.f32 0.0, %v519
    %v521 = vpop.f32.mrb[0].mxu0
    %522 = vmatprep.mubr.bf16.mxu0 0
    %523 = vmatmul.mubr.bf16.gmra.mrb[0].mxu0 %v447
    %v524 = vpop.f32.mrb[0].mxu0
    %v525 = vadd.f32 0.0, %v524
    %v526 = vpop.f32.mrb[0].mxu0
    %v527 = vpop.f32.mrb[0].mxu0
    %v528 = vadd.f32 0.0, %v527
    %v529 = vpop.f32.mrb[0].mxu0
    %530 = vmatprep.mubr.bf16.mxu0 0
    %531 = vmatmul.mubr.bf16.gmra.mrb[0].mxu0 %v450
    %v532 = vpop.f32.mrb[0].mxu0
    %v533 = vadd.f32 0.0, %v532
    %v534 = vpop.f32.mrb[0].mxu0
    %v535 = vpop.f32.mrb[0].mxu0
    %v536 = vadd.f32 0.0, %v535
    %v537 = vpop.f32.mrb[0].mxu0
    %538 = vmatprep.mubr.bf16.mxu0 0
    %539 = vmatmul.mubr.bf16.gmra.mrb[0].mxu0 %v453
    %v540 = vpop.f32.mrb[0].mxu0
    %v541 = vadd.f32 0.0, %v540
    %v542 = vpop.f32.mrb[0].mxu0
    %v543 = vpop.f32.mrb[0].mxu0
    %v544 = vadd.f32 0.0, %v543
    %v545 = vpop.f32.mrb[0].mxu0
    %546 = vmatprep.mubr.bf16.mxu0 0
    %547 = vmatmul.mubr.bf16.gmra.mrb[0].mxu0 %v456
    %v548 = vpop.f32.mrb[0].mxu0
    %v549 = vadd.f32 0.0, %v548
    %v550 = vpop.f32.mrb[0].mxu0
    %v551 = vpop.f32.mrb[0].mxu0
    %v552 = vadd.f32 0.0, %v551
    %v553 = vpop.f32.mrb[0].mxu0
    %554 = vdwg.mxu0
    %v555 = vld [vmem:[#allocation2] sm:$0x1]
    %557 = vset.pattern.permute.xlu0 0
    %558 = vperm.xlu0 %557, %v555
    %v559 = vpop.permute.xlu0 %558
    %v561 = vlaneseq
    %v562 = vshrl.u32 %v561, 7
    %v563 = vsub.s32 0, %v562
    %v564 = vrot.slane %v559, %v563
    %v565 = vadd.f32 %v493, %v564
    %v566 = vadd.f32 %v496, %v564
    %v567 = vadd.f32 %v501, %v564
    %v568 = vadd.f32 %v504, %v564
    %v569 = vadd.f32 %v509, %v564
    %v570 = vadd.f32 %v512, %v564
    %v571 = vadd.f32 %v517, %v564
    %v572 = vadd.f32 %v520, %v564
    %v573 = vadd.f32 %v525, %v564
    %v574 = vadd.f32 %v528, %v564
    %v575 = vadd.f32 %v533, %v564
    %v576 = vadd.f32 %v536, %v564
    %v577 = vadd.f32 %v541, %v564
    %v578 = vadd.f32 %v544, %v564
    %v579 = vadd.f32 %v549, %v564
    %v580 = vadd.f32 %v552, %v564
    %v581 = vxor.u32 %v565, 2147483648
    %v582 = vxor.u32 %v566, 2147483648
    %v583 = vxor.u32 %v567, 2147483648
    %v584 = vxor.u32 %v568, 2147483648
    %v585 = vxor.u32 %v569, 2147483648
    %v586 = vxor.u32 %v570, 2147483648
    %v587 = vxor.u32 %v571, 2147483648
    %v588 = vxor.u32 %v572, 2147483648
    %v589 = vxor.u32 %v573, 2147483648
    %v590 = vxor.u32 %v574, 2147483648
    %v591 = vxor.u32 %v575, 2147483648
    %v592 = vxor.u32 %v576, 2147483648
    %v593 = vxor.u32 %v577, 2147483648
    %v594 = vxor.u32 %v578, 2147483648
    %v595 = vxor.u32 %v579, 2147483648
    %v596 = vxor.u32 %v580, 2147483648
    %v597 = vmul.f32 %v581, 1.442695
    %v598 = vpow.pop %v597
    %v599 = vmul.f32 %v582, 1.442695
    %v600 = vpow.pop %v599
    %v601 = vmul.f32 %v583, 1.442695
    %v602 = vpow.pop %v601
    %v603 = vmul.f32 %v584, 1.442695
    %v604 = vpow.pop %v603
    %v605 = vmul.f32 %v585, 1.442695
    %v606 = vpow.pop %v605
    %v607 = vmul.f32 %v586, 1.442695
    %v608 = vpow.pop %v607
    %v609 = vmul.f32 %v587, 1.442695
    %v610 = vpow.pop %v609
    %v611 = vmul.f32 %v588, 1.442695
    %v612 = vpow.pop %v611
    %v613 = vmul.f32 %v589, 1.442695
    %v614 = vpow.pop %v613
    %v615 = vmul.f32 %v590, 1.442695
    %v616 = vpow.pop %v615
    %v617 = vmul.f32 %v591, 1.442695
    %v618 = vpow.pop %v617
    %v619 = vmul.f32 %v592, 1.442695
    %v620 = vpow.pop %v619
    %v621 = vmul.f32 %v593, 1.442695
    %v622 = vpow.pop %v621
    %v623 = vmul.f32 %v594, 1.442695
    %v624 = vpow.pop %v623
    %v625 = vmul.f32 %v595, 1.442695
    %v626 = vpow.pop %v625
    %v627 = vmul.f32 %v596, 1.442695
    %v628 = vpow.pop %v627
    %v629 = vadd.f32 %v598, 1.0
    %v630 = vadd.f32 %v600, 1.0
    %v631 = vadd.f32 %v602, 1.0
    %v632 = vadd.f32 %v604, 1.0
    %v633 = vadd.f32 %v606, 1.0
    %v634 = vadd.f32 %v608, 1.0
    %v635 = vadd.f32 %v610, 1.0
    %v636 = vadd.f32 %v612, 1.0
    %v637 = vadd.f32 %v614, 1.0
    %v638 = vadd.f32 %v616, 1.0
    %v639 = vadd.f32 %v618, 1.0
    %v640 = vadd.f32 %v620, 1.0
    %v641 = vadd.f32 %v622, 1.0
    %v642 = vadd.f32 %v624, 1.0
    %v643 = vadd.f32 %v626, 1.0
    %v644 = vadd.f32 %v628, 1.0
    %v645 = vrcp.pop %v629
    %v646 = vmul.f32 1.0, %v645
    %v647 = vrcp.pop %v630
    %v648 = vmul.f32 1.0, %v647
    %v649 = vrcp.pop %v631
    %v650 = vmul.f32 1.0, %v649
    %v651 = vrcp.pop %v632
    %v652 = vmul.f32 1.0, %v651
    %v653 = vrcp.pop %v633
    %v654 = vmul.f32 1.0, %v653
    %v655 = vrcp.pop %v634
    %v656 = vmul.f32 1.0, %v655
    %v657 = vrcp.pop %v635
    %v658 = vmul.f32 1.0, %v657
    %v659 = vrcp.pop %v636
    %v660 = vmul.f32 1.0, %v659
    %v661 = vrcp.pop %v637
    %v662 = vmul.f32 1.0, %v661
    %v663 = vrcp.pop %v638
    %v664 = vmul.f32 1.0, %v663
    %v665 = vrcp.pop %v639
    %v666 = vmul.f32 1.0, %v665
    %v667 = vrcp.pop %v640
    %v668 = vmul.f32 1.0, %v667
    %v669 = vrcp.pop %v641
    %v670 = vmul.f32 1.0, %v669
    %v671 = vrcp.pop %v642
    %v672 = vmul.f32 1.0, %v671
    %v673 = vrcp.pop %v643
    %v674 = vmul.f32 1.0, %v673
    %v675 = vrcp.pop %v644
    %v676 = vmul.f32 1.0, %v675
    %693 = vset.pattern.permute.xlu0 0
    %694 = vperm.xlu0 %693, %v646
    %v695 = vpop.permute.xlu0 %694
    %696 = vset.pattern.permute.xlu0 0
    %697 = vperm.xlu0 %696, %v648
    %v698 = vpop.permute.xlu0 %697
    %699 = vset.pattern.permute.xlu0 0
    %700 = vperm.xlu0 %699, %v650
    %v701 = vpop.permute.xlu0 %700
    %702 = vset.pattern.permute.xlu0 0
    %703 = vperm.xlu0 %702, %v652
    %v704 = vpop.permute.xlu0 %703
    %705 = vset.pattern.permute.xlu0 0
    %706 = vperm.xlu0 %705, %v654
    %v707 = vpop.permute.xlu0 %706
    %708 = vset.pattern.permute.xlu0 0
    %709 = vperm.xlu0 %708, %v656
    %v710 = vpop.permute.xlu0 %709
    %711 = vset.pattern.permute.xlu0 0
    %712 = vperm.xlu0 %711, %v658
    %v713 = vpop.permute.xlu0 %712
    %714 = vset.pattern.permute.xlu0 0
    %715 = vperm.xlu0 %714, %v660
    %v716 = vpop.permute.xlu0 %715
    %717 = vset.pattern.permute.xlu0 0
    %718 = vperm.xlu0 %717, %v662
    %v719 = vpop.permute.xlu0 %718
    %720 = vset.pattern.permute.xlu0 0
    %721 = vperm.xlu0 %720, %v664
    %v722 = vpop.permute.xlu0 %721
    %723 = vset.pattern.permute.xlu0 0
    %724 = vperm.xlu0 %723, %v666
    %v725 = vpop.permute.xlu0 %724
    %726 = vset.pattern.permute.xlu0 0
    %727 = vperm.xlu0 %726, %v668
    %v728 = vpop.permute.xlu0 %727
    %729 = vset.pattern.permute.xlu0 0
    %730 = vperm.xlu0 %729, %v670
    %v731 = vpop.permute.xlu0 %730
    %732 = vset.pattern.permute.xlu0 0
    %733 = vperm.xlu0 %732, %v672
    %v734 = vpop.permute.xlu0 %733
    %735 = vset.pattern.permute.xlu0 0
    %736 = vperm.xlu0 %735, %v674
    %v737 = vpop.permute.xlu0 %736
    %738 = vset.pattern.permute.xlu0 0
    %739 = vperm.xlu0 %738, %v676
    %v740 = vpop.permute.xlu0 %739
    %v741 = vlaneseq
    %v742 = vand.u32 %v741, 127
    %v743 = vlaneseq
    %v744 = vshrl.u32 %v743, 7
    %v745 = vsub.s32 %v742, %v744
    %v746 = vrot.slane %v695, %v745
    %v747 = vadd.s32 %v742, 4294967288
    %v748 = vlaneseq
    %v749 = vshrl.u32 %v748, 7
    %v750 = vsub.s32 %v747, %v749
    %v751 = vrot.slane %v698, %v750
    %vm752 = vcmask 130112
    %v753 = vsel %vm752, %v751, %v746
    %v754 = vadd.s32 %v742, 4294967280
    %v755 = vlaneseq
    %v756 = vshrl.u32 %v755, 7
    %v757 = vsub.s32 %v754, %v756
    %v758 = vrot.slane %v701, %v757
    %vm759 = vcmask 195712
    %v760 = vsel %vm759, %v758, %v753
    %v761 = vadd.s32 %v742, 4294967272
    %v762 = vlaneseq
    %v763 = vshrl.u32 %v762, 7
    %v764 = vsub.s32 %v761, %v763
    %v765 = vrot.slane %v704, %v764
    %vm766 = vcmask 261312
    %v767 = vsel %vm766, %v765, %v760
    %v768 = vadd.s32 %v742, 4294967264
    %v769 = vlaneseq
    %v770 = vshrl.u32 %v769, 7
    %v771 = vsub.s32 %v768, %v770
    %v772 = vrot.slane %v707, %v771
    %vm773 = vcmask 326912
    %v774 = vsel %vm773, %v772, %v767
    %v775 = vadd.s32 %v742, 4294967256
    %v776 = vlaneseq
    %v777 = vshrl.u32 %v776, 7
    %v778 = vsub.s32 %v775, %v777
    %v779 = vrot.slane %v710, %v778
    %vm780 = vcmask 392512
    %v781 = vsel %vm780, %v779, %v774
    %v782 = vadd.s32 %v742, 4294967248
    %v783 = vlaneseq
    %v784 = vshrl.u32 %v783, 7
    %v785 = vsub.s32 %v782, %v784
    %v786 = vrot.slane %v713, %v785
    %vm787 = vcmask 458112
    %v788 = vsel %vm787, %v786, %v781
    %v789 = vadd.s32 %v742, 4294967240
    %v790 = vlaneseq
    %v791 = vshrl.u32 %v790, 7
    %v792 = vsub.s32 %v789, %v791
    %v793 = vrot.slane %v716, %v792
    %vm794 = vcmask 523712
    %v795 = vsel %vm794, %v793, %v788
    %v796 = vadd.s32 %v742, 4294967232
    %v797 = vlaneseq
    %v798 = vshrl.u32 %v797, 7
    %v799 = vsub.s32 %v796, %v798
    %v800 = vrot.slane %v719, %v799
    %vm801 = vcmask 589312
    %v802 = vsel %vm801, %v800, %v795
    %v803 = vadd.s32 %v742, 4294967224
    %v804 = vlaneseq
    %v805 = vshrl.u32 %v804, 7
    %v806 = vsub.s32 %v803, %v805
    %v807 = vrot.slane %v722, %v806
    %vm808 = vcmask 654912
    %v809 = vsel %vm808, %v807, %v802
    %v810 = vadd.s32 %v742, 4294967216
    %v811 = vlaneseq
    %v812 = vshrl.u32 %v811, 7
    %v813 = vsub.s32 %v810, %v812
    %v814 = vrot.slane %v725, %v813
    %vm815 = vcmask 720512
    %v816 = vsel %vm815, %v814, %v809
    %v817 = vadd.s32 %v742, 4294967208
    %v818 = vlaneseq
    %v819 = vshrl.u32 %v818, 7
    %v820 = vsub.s32 %v817, %v819
    %v821 = vrot.slane %v728, %v820
    %vm822 = vcmask 786112
    %v823 = vsel %vm822, %v821, %v816
    %v824 = vadd.s32 %v742, 4294967200
    %v825 = vlaneseq
    %v826 = vshrl.u32 %v825, 7
    %v827 = vsub.s32 %v824, %v826
    %v828 = vrot.slane %v731, %v827
    %vm829 = vcmask 851712
    %v830 = vsel %vm829, %v828, %v823
    %v831 = vadd.s32 %v742, 4294967192
    %v832 = vlaneseq
    %v833 = vshrl.u32 %v832, 7
    %v834 = vsub.s32 %v831, %v833
    %v835 = vrot.slane %v734, %v834
    %vm836 = vcmask 917312
    %v837 = vsel %vm836, %v835, %v830
    %v838 = vadd.s32 %v742, 4294967184
    %v839 = vlaneseq
    %v840 = vshrl.u32 %v839, 7
    %v841 = vsub.s32 %v838, %v840
    %v842 = vrot.slane %v737, %v841
    %vm843 = vcmask 982912
    %v844 = vsel %vm843, %v842, %v837
    %v845 = vadd.s32 %v742, 4294967176
    %v846 = vlaneseq
    %v847 = vshrl.u32 %v846, 7
    %v848 = vsub.s32 %v845, %v847
    %v849 = vrot.slane %v740, %v848
    %vm850 = vcmask 1048512
    %v851 = vsel %vm850, %v849, %v844
    %853 = vst [vmem:[#allocation3] sm:$0x1] %v851
    // Predicated region
    $region22: #{tpu_custom_call.1} parent=1 // pred_check
      _
    $region23: #{tpu_custom_call.1} parent=1 // pred_check_branch
      %855 = sbr.rel (0) target = $region25
    $region24: #{tpu_custom_call.1} parent=1 // pred_region
      %s857 = ssub.s32 16, 16
      %858 = vsyncadd [#allocation4], %s857
      %s860 = sshll.u32 [#allocation3], 4
      %s861 = int_to_ptr.vmem [resolvable:$true] %s860
      %863 = dma.vmem_to_hbm [thread:$0]  %s861, 16, %s5, [#allocation4]
    $region25: #{tpu_custom_call.1} parent=1 // pred_fallthru
      _
    // Predicated region
    $region26: #{tpu_custom_call.1} parent=1 // pred_check
      _
    $region27: #{tpu_custom_call.1} parent=1 // pred_check_branch
      %865 = sbr.rel (0) target = $region29
    $region28: #{tpu_custom_call.1} parent=1 // pred_region
      %866 = dma.done [#allocation4], 16
    $region29: #{tpu_custom_call.1} parent=1 // pred_fallthru
      _
    %867 = vsyncpa [#allocation4], 1

// kernel: tpu_custom_call.1
$region0: #{tpu_custom_call.1}
  #allocation0 [shape = 'u32[]', space=smem, size = 0x4, offset = 0x4, fixed_abs, tag = 'smem constant byte address 0x4 - core index']
  #allocation1 [shape = 'u32[144,128]{1,0:T(1,128)}', space=vmem, size = 0x12000, scoped, tag = 'internal scratch']
  #allocation2 [shape = 'f32[1,1]{1,0:T(1,128)S(1)}', space=vmem, size = 0x200, scoped, tag = 'scoped memory for tpu_custom_call.1']
  %s0 = inlined_call_operand.vmem [shape: f32[16,96], index: 0, kind: input, shape index: {}]
  %s1 = inlined_call_operand.vmem [shape: bf16[160,32], index: 1, kind: input, shape index: {}]
  %s2 = inlined_call_operand.vmem [shape: f32[1,32], index: 2, kind: input, shape index: {}]
  %s3 = inlined_call_operand.vmem [shape: f32[1,32], index: 3, kind: input, shape index: {}]
  %s4 = inlined_call_operand.<no memory space> [shape: f32[1,1], index: 4, kind: input, shape index: {}]
  %s5 = inlined_call_operand.vmem [shape: f32[128,1], index: 5, kind: output, shape index: {}]
  %s6 = sld [smem:[#allocation0]]
  $region30: #{tpu_custom_call.1} parent=0
    _
  %s8 = ssub.s32 1, %s6
  %s9 = scalar_select 0, %s8, %s6
  %v10 = vstv %s4
  %11 = vst [vmem:[#allocation2] sm:$0x1] %v10
  // Predicated region
  $region2: #{tpu_custom_call.1} parent=0 // pred_check
    _
  $region3: #{tpu_custom_call.1} parent=0 // pred_check_branch
    %13 = sbr.rel (0) target = $region5
  $region4: #{tpu_custom_call.1} parent=0 // pred_region
    _
  $region5: #{tpu_custom_call.1} parent=0 // pred_fallthru
    _
  // Predicated region
  $region6: #{tpu_custom_call.1} parent=0 // pred_check
    _
  $region7: #{tpu_custom_call.1} parent=0 // pred_check_branch
    %15 = sbr.rel (0) target = $region9
  $region8: #{tpu_custom_call.1} parent=0 // pred_region
    _
  $region9: #{tpu_custom_call.1} parent=0 // pred_fallthru
    _
  // Predicated region
  $region10: #{tpu_custom_call.1} parent=0 // pred_check
    _
  $region11: #{tpu_custom_call.1} parent=0 // pred_check_branch
    %17 = sbr.rel (0) target = $region13
  $region12: #{tpu_custom_call.1} parent=0 // pred_region
    _
  $region13: #{tpu_custom_call.1} parent=0 // pred_fallthru
    _
  // Predicated region
  $region14: #{tpu_custom_call.1} parent=0 // pred_check
    _
  $region15: #{tpu_custom_call.1} parent=0 // pred_check_branch
    %19 = sbr.rel (0) target = $region17
  $region16: #{tpu_custom_call.1} parent=0 // pred_region
    _
  $region17: #{tpu_custom_call.1} parent=0 // pred_fallthru
    _
  // Predicated region
  $region18: #{tpu_custom_call.1} parent=0 // pred_check
    _
  $region19: #{tpu_custom_call.1} parent=0 // pred_check_branch
    %21 = sbr.rel (0) target = $region21
  $region20: #{tpu_custom_call.1} parent=0 // pred_region
    _
  $region21: #{tpu_custom_call.1} parent=0 // pred_fallthru
    _
  %v23 = vld [vmem:[%s0] sm:$0xff]
  %v24 = vld [vmem:[%s0 + $0x8] sm:$0xff]
  %v25 = vld [vmem:[%s0 + $0x10] sm:$0xff]
  %v26 = vld [vmem:[%s0 + $0x18] sm:$0xff]
  %v27 = vld [vmem:[%s0 + $0x20] sm:$0xff]
  %v28 = vld [vmem:[%s0 + $0x28] sm:$0xff]
  %v29 = vld [vmem:[%s0 + $0x30] sm:$0xff]
  %v30 = vld [vmem:[%s0 + $0x38] sm:$0xff]
  %v31 = vld [vmem:[%s0 + $0x40] sm:$0xff]
  %v32 = vld [vmem:[%s0 + $0x48] sm:$0xff]
  %v33 = vld [vmem:[%s0 + $0x50] sm:$0xff]
  %v34 = vld [vmem:[%s0 + $0x58] sm:$0xff]
  %v35 = vld [vmem:[%s0 + $0x60] sm:$0xff]
  %v36 = vld [vmem:[%s0 + $0x68] sm:$0xff]
  %v37 = vld [vmem:[%s0 + $0x70] sm:$0xff]
  %v38 = vld [vmem:[%s0 + $0x78] sm:$0xff]
  %v39 = vpack.c.bf16 %v24, %v23
  %v40 = vpack.c.bf16 %v26, %v25
  %v41 = vpack.c.bf16 %v28, %v27
  %v42 = vpack.c.bf16 %v30, %v29
  %v43 = vpack.c.bf16 %v32, %v31
  %v44 = vpack.c.bf16 %v34, %v33
  %v45 = vpack.c.bf16 %v36, %v35
  %v46 = vpack.c.bf16 %v38, %v37
  %v47 = vld [vmem:[%s1] sm:$0xf]
  %v48 = vld [vmem:[%s1 + $0x4] sm:$0xf]
  %v49 = vld [vmem:[%s1 + $0x8] sm:$0xf]
  %v50 = vld [vmem:[%s1 + $0xc] sm:$0xf]
  %v51 = vld [vmem:[%s1 + $0x10] sm:$0xf]
  %v52 = vld [vmem:[%s1 + $0x14] sm:$0xf]
  %v53 = vld [vmem:[%s1 + $0x18] sm:$0xf]
  %v54 = vld [vmem:[%s1 + $0x1c] sm:$0xf]
  %v55 = vld [vmem:[%s1 + $0x20] sm:$0xf]
  %v56 = vld [vmem:[%s1 + $0x24] sm:$0xf]
  %v57 = vld [vmem:[%s1 + $0x28] sm:$0xf]
  %v58 = vld [vmem:[%s1 + $0x2c] sm:$0xf]
  %v59 = vld [vmem:[%s1 + $0x30] sm:$0xf]
  %v60 = vld [vmem:[%s1 + $0x34] sm:$0xf]
  %v61 = vld [vmem:[%s1 + $0x38] sm:$0xf]
  %v62 = vld [vmem:[%s1 + $0x3c] sm:$0xf]
  %v63 = vld [vmem:[%s1 + $0x40] sm:$0xf]
  %v64 = vld [vmem:[%s1 + $0x44] sm:$0xf]
  %v65 = vld [vmem:[%s1 + $0x48] sm:$0xf]
  %v66 = vld [vmem:[%s1 + $0x4c] sm:$0xf]
  %v67 = vld [vmem:[%s2] sm:$0x1]
  %v69 = vlaneseq
  %v70 = vshrl.u32 %v69, 7
  %v71 = vsub.s32 0, %v70
  %v72 = vrot.slane %v67, %v71
  %v86 = vunpack.c.l.b16 %v47
  %v87 = vunpack.c.l.b16 %v48
  %v88 = vunpack.c.l.b16 %v49
  %v89 = vunpack.c.l.b16 %v50
  %v90 = vunpack.c.l.b16 %v51
  %v91 = vunpack.c.l.b16 %v52
  %v92 = vunpack.c.l.b16 %v53
  %v93 = vunpack.c.l.b16 %v54
  %v94 = vunpack.c.l.b16 %v55
  %v95 = vunpack.c.l.b16 %v56
  %v96 = vunpack.c.l.b16 %v57
  %v97 = vunpack.c.l.b16 %v58
  %v98 = vpack.c.b16 %v87, %v86
  %v99 = vpack.c.b16 %v89, %v88
  %v100 = vpack.c.b16 %v91, %v90
  %v101 = vpack.c.b16 %v93, %v92
  %v102 = vpack.c.b16 %v95, %v94
  %v103 = vpack.c.b16 %v97, %v96
  %vm110 = vcmask 785408
  %v112 = vsel %vm110, %v39, 0
  %v115 = vsel %vm110, %v40, 0
  %v118 = vsel %vm110, %v41, 0
  %v121 = vsel %vm110, %v42, 0
  %v124 = vsel %vm110, %v43, 0
  %v127 = vsel %vm110, %v44, 0
  %v130 = vsel %vm110, %v45, 0
  %v133 = vsel %vm110, %v46, 0
  %135 = vmatprep.subr.bf16.mxu0 0
  %136 = vmatpush1.bf16.msra.mxu0 %v98
  %137 = vmatprep.subr.bf16.mxu0 0
  %138 = vmatpush1.bf16.msra.mxu0 %v99
  %139 = vmatprep.subr.bf16.mxu0 0
  %140 = vmatpush1.bf16.msra.mxu0 %v100
  %141 = vmatprep.subr.bf16.mxu0 0
  %142 = vmatpush1.bf16.msra.mxu0 %v101
  %143 = vmatprep.subr.bf16.mxu0 0
  %144 = vmatpush1.bf16.msra.mxu0 %v102
  %145 = vmatprep.subr.bf16.mxu0 0
  %146 = vmatpush1.bf16.msra.mxu0 %v103
  %147 = vmatprep.subr.bf16.mxu0 0
  %148 = vmatpush1.bf16.msra.mxu0 0
  %149 = vmatprep.subr.bf16.mxu0 0
  %150 = vmatpush1.bf16.msra.mxu0 0
  %151 = vmatprep.subr.bf16.mxu0 0
  %152 = vmatpush1.bf16.msra.mxu0 0
  %153 = vmatprep.subr.bf16.mxu0 0
  %154 = vmatpush1.bf16.msra.mxu0 0
  %155 = vmatprep.subr.bf16.mxu0 0
  %156 = vmatpush1.bf16.msra.mxu0 0
  %157 = vmatprep.subr.bf16.mxu0 0
  %158 = vmatpush1.bf16.msra.mxu0 0
  %159 = vmatprep.subr.bf16.mxu0 0
  %160 = vmatpush1.bf16.msra.mxu0 0
  %161 = vmatprep.subr.bf16.mxu0 0
  %162 = vmatpush1.bf16.msra.mxu0 0
  %163 = vmatprep.subr.bf16.mxu0 0
  %164 = vmatpush1.bf16.msra.mxu0 0
  %165 = vmatprep.subr.bf16.mxu0 0
  %166 = vmatpush1.bf16.msra.mxu0 0
  %167 = vmatprep.mubr.bf16.mxu0 0
  %168 = vmatmul.mubr.bf16.gmra.mrb[0].mxu0 %v112
  %v169 = vpop.f32.mrb[0].mxu0
  %v170 = vadd.f32 %v72, %v169
  %v171 = vpop.f32.mrb[0].mxu0
  %v172 = vpop.f32.mrb[0].mxu0
  %v173 = vadd.f32 %v72, %v172
  %v174 = vpop.f32.mrb[0].mxu0
  %175 = vmatprep.mubr.bf16.mxu0 0
  %176 = vmatmul.mubr.bf16.gmra.mrb[0].mxu0 %v115
  %v177 = vpop.f32.mrb[0].mxu0
  %v178 = vadd.f32 %v72, %v177
  %v179 = vpop.f32.mrb[0].mxu0
  %v180 = vpop.f32.mrb[0].mxu0
  %v181 = vadd.f32 %v72, %v180
  %v182 = vpop.f32.mrb[0].mxu0
  %183 = vmatprep.mubr.bf16.mxu0 0
  %184 = vmatmul.mubr.bf16.gmra.mrb[0].mxu0 %v118
  %v185 = vpop.f32.mrb[0].mxu0
  %v186 = vadd.f32 %v72, %v185
  %v187 = vpop.f32.mrb[0].mxu0
  %v188 = vpop.f32.mrb[0].mxu0
  %v189 = vadd.f32 %v72, %v188
  %v190 = vpop.f32.mrb[0].mxu0
  %191 = vmatprep.mubr.bf16.mxu0 0
  %192 = vmatmul.mubr.bf16.gmra.mrb[0].mxu0 %v121
  %v193 = vpop.f32.mrb[0].mxu0
  %v194 = vadd.f32 %v72, %v193
  %v195 = vpop.f32.mrb[0].mxu0
  %v196 = vpop.f32.mrb[0].mxu0
  %v197 = vadd.f32 %v72, %v196
  %v198 = vpop.f32.mrb[0].mxu0
  %199 = vmatprep.mubr.bf16.mxu0 0
  %200 = vmatmul.mubr.bf16.gmra.mrb[0].mxu0 %v124
  %v201 = vpop.f32.mrb[0].mxu0
  %v202 = vadd.f32 %v72, %v201
  %v203 = vpop.f32.mrb[0].mxu0
  %v204 = vpop.f32.mrb[0].mxu0
  %v205 = vadd.f32 %v72, %v204
  %v206 = vpop.f32.mrb[0].mxu0
  %207 = vmatprep.mubr.bf16.mxu0 0
  %208 = vmatmul.mubr.bf16.gmra.mrb[0].mxu0 %v127
  %v209 = vpop.f32.mrb[0].mxu0
  %v210 = vadd.f32 %v72, %v209
  %v211 = vpop.f32.mrb[0].mxu0
  %v212 = vpop.f32.mrb[0].mxu0
  %v213 = vadd.f32 %v72, %v212
  %v214 = vpop.f32.mrb[0].mxu0
  %215 = vmatprep.mubr.bf16.mxu0 0
  %216 = vmatmul.mubr.bf16.gmra.mrb[0].mxu0 %v130
  %v217 = vpop.f32.mrb[0].mxu0
  %v218 = vadd.f32 %v72, %v217
  %v219 = vpop.f32.mrb[0].mxu0
  %v220 = vpop.f32.mrb[0].mxu0
  %v221 = vadd.f32 %v72, %v220
  %v222 = vpop.f32.mrb[0].mxu0
  %223 = vmatprep.mubr.bf16.mxu0 0
  %224 = vmatmul.mubr.bf16.gmra.mrb[0].mxu0 %v133
  %v225 = vpop.f32.mrb[0].mxu0
  %v226 = vadd.f32 %v72, %v225
  %v227 = vpop.f32.mrb[0].mxu0
  %v228 = vpop.f32.mrb[0].mxu0
  %v229 = vadd.f32 %v72, %v228
  %v230 = vpop.f32.mrb[0].mxu0
  %231 = vdwg.mxu0
  %v232 = vmax.f32 %v170, 0.0
  %v233 = vmax.f32 %v173, 0.0
  %v234 = vmax.f32 %v178, 0.0
  %v235 = vmax.f32 %v181, 0.0
  %v236 = vmax.f32 %v186, 0.0
  %v237 = vmax.f32 %v189, 0.0
  %v238 = vmax.f32 %v194, 0.0
  %v239 = vmax.f32 %v197, 0.0
  %v240 = vmax.f32 %v202, 0.0
  %v241 = vmax.f32 %v205, 0.0
  %v242 = vmax.f32 %v210, 0.0
  %v243 = vmax.f32 %v213, 0.0
  %v244 = vmax.f32 %v218, 0.0
  %v245 = vmax.f32 %v221, 0.0
  %v246 = vmax.f32 %v226, 0.0
  %v247 = vmax.f32 %v229, 0.0
  %v248 = vpack.c.bf16 %v233, %v232
  %v249 = vpack.c.bf16 %v235, %v234
  %v250 = vpack.c.bf16 %v237, %v236
  %v251 = vpack.c.bf16 %v239, %v238
  %v252 = vpack.c.bf16 %v241, %v240
  %v253 = vpack.c.bf16 %v243, %v242
  %v254 = vpack.c.bf16 %v245, %v244
  %v255 = vpack.c.bf16 %v247, %v246
  %v256 = vld [vmem:[%s3] sm:$0x1]
  %v258 = vlaneseq
  %v259 = vshrl.u32 %v258, 7
  %v260 = vsub.s32 0, %v259
  %v261 = vrot.slane %v256, %v260
  %v267 = vunpack.c.l.b16 %v59
  %v268 = vunpack.c.l.b16 %v60
  %v269 = vunpack.c.l.b16 %v61
  %v270 = vunpack.c.l.b16 %v62
  %v271 = vpack.c.b16 %v268, %v267
  %v272 = vpack.c.b16 %v270, %v269
  %vm275 = vcmask 261120
  %v277 = vsel %vm275, %v248, 0
  %v280 = vsel %vm275, %v249, 0
  %v283 = vsel %vm275, %v250, 0
  %v286 = vsel %vm275, %v251, 0
  %v289 = vsel %vm275, %v252, 0
  %v292 = vsel %vm275, %v253, 0
  %v295 = vsel %vm275, %v254, 0
  %v298 = vsel %vm275, %v255, 0
  %300 = vmatprep.subr.bf16.mxu0 0
  %301 = vmatpush1.bf16.msra.mxu0 %v271
  %302 = vmatprep.subr.bf16.mxu0 0
  %303 = vmatpush1.bf16.msra.mxu0 %v272
  %304 = vmatprep.subr.bf16.mxu0 0
  %305 = vmatpush1.bf16.msra.mxu0 0
  %306 = vmatprep.subr.bf16.mxu0 0
  %307 = vmatpush1.bf16.msra.mxu0 0
  %308 = vmatprep.subr.bf16.mxu0 0
  %309 = vmatpush1.bf16.msra.mxu0 0
  %310 = vmatprep.subr.bf16.mxu0 0
  %311 = vmatpush1.bf16.msra.mxu0 0
  %312 = vmatprep.subr.bf16.mxu0 0
  %313 = vmatpush1.bf16.msra.mxu0 0
  %314 = vmatprep.subr.bf16.mxu0 0
  %315 = vmatpush1.bf16.msra.mxu0 0
  %316 = vmatprep.subr.bf16.mxu0 0
  %317 = vmatpush1.bf16.msra.mxu0 0
  %318 = vmatprep.subr.bf16.mxu0 0
  %319 = vmatpush1.bf16.msra.mxu0 0
  %320 = vmatprep.subr.bf16.mxu0 0
  %321 = vmatpush1.bf16.msra.mxu0 0
  %322 = vmatprep.subr.bf16.mxu0 0
  %323 = vmatpush1.bf16.msra.mxu0 0
  %324 = vmatprep.subr.bf16.mxu0 0
  %325 = vmatpush1.bf16.msra.mxu0 0
  %326 = vmatprep.subr.bf16.mxu0 0
  %327 = vmatpush1.bf16.msra.mxu0 0
  %328 = vmatprep.subr.bf16.mxu0 0
  %329 = vmatpush1.bf16.msra.mxu0 0
  %330 = vmatprep.subr.bf16.mxu0 0
  %331 = vmatpush1.bf16.msra.mxu0 0
  %332 = vmatprep.mubr.bf16.mxu0 0
  %333 = vmatmul.mubr.bf16.gmra.mrb[0].mxu0 %v277
  %v334 = vpop.f32.mrb[0].mxu0
  %v335 = vadd.f32 %v261, %v334
  %v336 = vpop.f32.mrb[0].mxu0
  %v337 = vpop.f32.mrb[0].mxu0
  %v338 = vadd.f32 %v261, %v337
  %v339 = vpop.f32.mrb[0].mxu0
  %340 = vmatprep.mubr.bf16.mxu0 0
  %341 = vmatmul.mubr.bf16.gmra.mrb[0].mxu0 %v280
  %v342 = vpop.f32.mrb[0].mxu0
  %v343 = vadd.f32 %v261, %v342
  %v344 = vpop.f32.mrb[0].mxu0
  %v345 = vpop.f32.mrb[0].mxu0
  %v346 = vadd.f32 %v261, %v345
  %v347 = vpop.f32.mrb[0].mxu0
  %348 = vmatprep.mubr.bf16.mxu0 0
  %349 = vmatmul.mubr.bf16.gmra.mrb[0].mxu0 %v283
  %v350 = vpop.f32.mrb[0].mxu0
  %v351 = vadd.f32 %v261, %v350
  %v352 = vpop.f32.mrb[0].mxu0
  %v353 = vpop.f32.mrb[0].mxu0
  %v354 = vadd.f32 %v261, %v353
  %v355 = vpop.f32.mrb[0].mxu0
  %356 = vmatprep.mubr.bf16.mxu0 0
  %357 = vmatmul.mubr.bf16.gmra.mrb[0].mxu0 %v286
  %v358 = vpop.f32.mrb[0].mxu0
  %v359 = vadd.f32 %v261, %v358
  %v360 = vpop.f32.mrb[0].mxu0
  %v361 = vpop.f32.mrb[0].mxu0
  %v362 = vadd.f32 %v261, %v361
  %v363 = vpop.f32.mrb[0].mxu0
  %364 = vmatprep.mubr.bf16.mxu0 0
  %365 = vmatmul.mubr.bf16.gmra.mrb[0].mxu0 %v289
  %v366 = vpop.f32.mrb[0].mxu0
  %v367 = vadd.f32 %v261, %v366
  %v368 = vpop.f32.mrb[0].mxu0
  %v369 = vpop.f32.mrb[0].mxu0
  %v370 = vadd.f32 %v261, %v369
  %v371 = vpop.f32.mrb[0].mxu0
  %372 = vmatprep.mubr.bf16.mxu0 0
  %373 = vmatmul.mubr.bf16.gmra.mrb[0].mxu0 %v292
  %v374 = vpop.f32.mrb[0].mxu0
  %v375 = vadd.f32 %v261, %v374
  %v376 = vpop.f32.mrb[0].mxu0
  %v377 = vpop.f32.mrb[0].mxu0
  %v378 = vadd.f32 %v261, %v377
  %v379 = vpop.f32.mrb[0].mxu0
  %380 = vmatprep.mubr.bf16.mxu0 0
  %381 = vmatmul.mubr.bf16.gmra.mrb[0].mxu0 %v295
  %v382 = vpop.f32.mrb[0].mxu0
  %v383 = vadd.f32 %v261, %v382
  %v384 = vpop.f32.mrb[0].mxu0
  %v385 = vpop.f32.mrb[0].mxu0
  %v386 = vadd.f32 %v261, %v385
  %v387 = vpop.f32.mrb[0].mxu0
  %388 = vmatprep.mubr.bf16.mxu0 0
  %389 = vmatmul.mubr.bf16.gmra.mrb[0].mxu0 %v298
  %v390 = vpop.f32.mrb[0].mxu0
  %v391 = vadd.f32 %v261, %v390
  %v392 = vpop.f32.mrb[0].mxu0
  %v393 = vpop.f32.mrb[0].mxu0
  %v394 = vadd.f32 %v261, %v393
  %v395 = vpop.f32.mrb[0].mxu0
  %396 = vdwg.mxu0
  %v397 = vmax.f32 %v335, 0.0
  %v398 = vmax.f32 %v338, 0.0
  %v399 = vmax.f32 %v343, 0.0
  %v400 = vmax.f32 %v346, 0.0
  %v401 = vmax.f32 %v351, 0.0
  %v402 = vmax.f32 %v354, 0.0
  %v403 = vmax.f32 %v359, 0.0
  %v404 = vmax.f32 %v362, 0.0
  %v405 = vmax.f32 %v367, 0.0
  %v406 = vmax.f32 %v370, 0.0
  %v407 = vmax.f32 %v375, 0.0
  %v408 = vmax.f32 %v378, 0.0
  %v409 = vmax.f32 %v383, 0.0
  %v410 = vmax.f32 %v386, 0.0
  %v411 = vmax.f32 %v391, 0.0
  %v412 = vmax.f32 %v394, 0.0
  %v413 = vpack.c.bf16 %v398, %v397
  %v414 = vpack.c.bf16 %v400, %v399
  %v415 = vpack.c.bf16 %v402, %v401
  %v416 = vpack.c.bf16 %v404, %v403
  %v417 = vpack.c.bf16 %v406, %v405
  %v418 = vpack.c.bf16 %v408, %v407
  %v419 = vpack.c.bf16 %v410, %v409
  %v420 = vpack.c.bf16 %v412, %v411
  %v421 = vld [vmem:[#allocation2] sm:$0x1]
  %v423 = vlaneseq
  %v424 = vshrl.u32 %v423, 7
  %v425 = vsub.s32 0, %v424
  %v426 = vrot.slane %v421, %v425
  %v432 = vunpack.c.l.b16 %v63
  %v433 = vunpack.c.l.b16 %v64
  %v434 = vunpack.c.l.b16 %v65
  %v435 = vunpack.c.l.b16 %v66
  %v436 = vpack.c.b16 %v433, %v432
  %v437 = vpack.c.b16 %v435, %v434
  %v441 = vsel %vm275, %v413, 0
  %v444 = vsel %vm275, %v414, 0
  %v447 = vsel %vm275, %v415, 0
  %v450 = vsel %vm275, %v416, 0
  %v453 = vsel %vm275, %v417, 0
  %v456 = vsel %vm275, %v418, 0
  %v459 = vsel %vm275, %v419, 0
  %v462 = vsel %vm275, %v420, 0
  %464 = vmatprep.subr.bf16.mxu0 0
  %465 = vmatpush1.bf16.msra.mxu0 %v436
  %466 = vmatprep.subr.bf16.mxu0 0
  %467 = vmatpush1.bf16.msra.mxu0 %v437
  %468 = vmatprep.subr.bf16.mxu0 0
  %469 = vmatpush1.bf16.msra.mxu0 0
  %470 = vmatprep.subr.bf16.mxu0 0
  %471 = vmatpush1.bf16.msra.mxu0 0
  %472 = vmatprep.subr.bf16.mxu0 0
  %473 = vmatpush1.bf16.msra.mxu0 0
  %474 = vmatprep.subr.bf16.mxu0 0
  %475 = vmatpush1.bf16.msra.mxu0 0
  %476 = vmatprep.subr.bf16.mxu0 0
  %477 = vmatpush1.bf16.msra.mxu0 0
  %478 = vmatprep.subr.bf16.mxu0 0
  %479 = vmatpush1.bf16.msra.mxu0 0
  %480 = vmatprep.subr.bf16.mxu0 0
  %481 = vmatpush1.bf16.msra.mxu0 0
  %482 = vmatprep.subr.bf16.mxu0 0
  %483 = vmatpush1.bf16.msra.mxu0 0
  %484 = vmatprep.subr.bf16.mxu0 0
  %485 = vmatpush1.bf16.msra.mxu0 0
  %486 = vmatprep.subr.bf16.mxu0 0
  %487 = vmatpush1.bf16.msra.mxu0 0
  %488 = vmatprep.subr.bf16.mxu0 0
  %489 = vmatpush1.bf16.msra.mxu0 0
  %490 = vmatprep.subr.bf16.mxu0 0
  %491 = vmatpush1.bf16.msra.mxu0 0
  %492 = vmatprep.subr.bf16.mxu0 0
  %493 = vmatpush1.bf16.msra.mxu0 0
  %494 = vmatprep.subr.bf16.mxu0 0
  %495 = vmatpush1.bf16.msra.mxu0 0
  %496 = vmatprep.mubr.bf16.mxu0 0
  %497 = vmatmul.mubr.bf16.gmra.mrb[0].mxu0 %v441
  %v498 = vpop.f32.mrb[0].mxu0
  %v499 = vadd.f32 %v426, %v498
  %v500 = vpop.f32.mrb[0].mxu0
  %v501 = vpop.f32.mrb[0].mxu0
  %v502 = vadd.f32 %v426, %v501
  %v503 = vpop.f32.mrb[0].mxu0
  %504 = vmatprep.mubr.bf16.mxu0 0
  %505 = vmatmul.mubr.bf16.gmra.mrb[0].mxu0 %v444
  %v506 = vpop.f32.mrb[0].mxu0
  %v507 = vadd.f32 %v426, %v506
  %v508 = vpop.f32.mrb[0].mxu0
  %v509 = vpop.f32.mrb[0].mxu0
  %v510 = vadd.f32 %v426, %v509
  %v511 = vpop.f32.mrb[0].mxu0
  %512 = vmatprep.mubr.bf16.mxu0 0
  %513 = vmatmul.mubr.bf16.gmra.mrb[0].mxu0 %v447
  %v514 = vpop.f32.mrb[0].mxu0
  %v515 = vadd.f32 %v426, %v514
  %v516 = vpop.f32.mrb[0].mxu0
  %v517 = vpop.f32.mrb[0].mxu0
  %v518 = vadd.f32 %v426, %v517
  %v519 = vpop.f32.mrb[0].mxu0
  %520 = vmatprep.mubr.bf16.mxu0 0
  %521 = vmatmul.mubr.bf16.gmra.mrb[0].mxu0 %v450
  %v522 = vpop.f32.mrb[0].mxu0
  %v523 = vadd.f32 %v426, %v522
  %v524 = vpop.f32.mrb[0].mxu0
  %v525 = vpop.f32.mrb[0].mxu0
  %v526 = vadd.f32 %v426, %v525
  %v527 = vpop.f32.mrb[0].mxu0
  %528 = vmatprep.mubr.bf16.mxu0 0
  %529 = vmatmul.mubr.bf16.gmra.mrb[0].mxu0 %v453
  %v530 = vpop.f32.mrb[0].mxu0
  %v531 = vadd.f32 %v426, %v530
  %v532 = vpop.f32.mrb[0].mxu0
  %v533 = vpop.f32.mrb[0].mxu0
  %v534 = vadd.f32 %v426, %v533
  %v535 = vpop.f32.mrb[0].mxu0
  %536 = vmatprep.mubr.bf16.mxu0 0
  %537 = vmatmul.mubr.bf16.gmra.mrb[0].mxu0 %v456
  %v538 = vpop.f32.mrb[0].mxu0
  %v539 = vadd.f32 %v426, %v538
  %v540 = vpop.f32.mrb[0].mxu0
  %v541 = vpop.f32.mrb[0].mxu0
  %v542 = vadd.f32 %v426, %v541
  %v543 = vpop.f32.mrb[0].mxu0
  %544 = vmatprep.mubr.bf16.mxu0 0
  %545 = vmatmul.mubr.bf16.gmra.mrb[0].mxu0 %v459
  %v546 = vpop.f32.mrb[0].mxu0
  %v547 = vadd.f32 %v426, %v546
  %v548 = vpop.f32.mrb[0].mxu0
  %v549 = vpop.f32.mrb[0].mxu0
  %v550 = vadd.f32 %v426, %v549
  %v551 = vpop.f32.mrb[0].mxu0
  %552 = vmatprep.mubr.bf16.mxu0 0
  %553 = vmatmul.mubr.bf16.gmra.mrb[0].mxu0 %v462
  %v554 = vpop.f32.mrb[0].mxu0
  %v555 = vadd.f32 %v426, %v554
  %v556 = vpop.f32.mrb[0].mxu0
  %v557 = vpop.f32.mrb[0].mxu0
  %v558 = vadd.f32 %v426, %v557
  %v559 = vpop.f32.mrb[0].mxu0
  %560 = vdwg.mxu0
  %v561 = vxor.u32 %v499, 2147483648
  %v562 = vxor.u32 %v502, 2147483648
  %v563 = vxor.u32 %v507, 2147483648
  %v564 = vxor.u32 %v510, 2147483648
  %v565 = vxor.u32 %v515, 2147483648
  %v566 = vxor.u32 %v518, 2147483648
  %v567 = vxor.u32 %v523, 2147483648
  %v568 = vxor.u32 %v526, 2147483648
  %v569 = vxor.u32 %v531, 2147483648
  %v570 = vxor.u32 %v534, 2147483648
  %v571 = vxor.u32 %v539, 2147483648
  %v572 = vxor.u32 %v542, 2147483648
  %v573 = vxor.u32 %v547, 2147483648
  %v574 = vxor.u32 %v550, 2147483648
  %v575 = vxor.u32 %v555, 2147483648
  %v576 = vxor.u32 %v558, 2147483648
  %v577 = vmul.f32 %v561, 1.442695
  %v578 = vpow.pop %v577
  %v579 = vmul.f32 %v562, 1.442695
  %v580 = vpow.pop %v579
  %v581 = vmul.f32 %v563, 1.442695
  %v582 = vpow.pop %v581
  %v583 = vmul.f32 %v564, 1.442695
  %v584 = vpow.pop %v583
  %v585 = vmul.f32 %v565, 1.442695
  %v586 = vpow.pop %v585
  %v587 = vmul.f32 %v566, 1.442695
  %v588 = vpow.pop %v587
  %v589 = vmul.f32 %v567, 1.442695
  %v590 = vpow.pop %v589
  %v591 = vmul.f32 %v568, 1.442695
  %v592 = vpow.pop %v591
  %v593 = vmul.f32 %v569, 1.442695
  %v594 = vpow.pop %v593
  %v595 = vmul.f32 %v570, 1.442695
  %v596 = vpow.pop %v595
  %v597 = vmul.f32 %v571, 1.442695
  %v598 = vpow.pop %v597
  %v599 = vmul.f32 %v572, 1.442695
  %v600 = vpow.pop %v599
  %v601 = vmul.f32 %v573, 1.442695
  %v602 = vpow.pop %v601
  %v603 = vmul.f32 %v574, 1.442695
  %v604 = vpow.pop %v603
  %v605 = vmul.f32 %v575, 1.442695
  %v606 = vpow.pop %v605
  %v607 = vmul.f32 %v576, 1.442695
  %v608 = vpow.pop %v607
  %v609 = vadd.f32 %v578, 1.0
  %v610 = vadd.f32 %v580, 1.0
  %v611 = vadd.f32 %v582, 1.0
  %v612 = vadd.f32 %v584, 1.0
  %v613 = vadd.f32 %v586, 1.0
  %v614 = vadd.f32 %v588, 1.0
  %v615 = vadd.f32 %v590, 1.0
  %v616 = vadd.f32 %v592, 1.0
  %v617 = vadd.f32 %v594, 1.0
  %v618 = vadd.f32 %v596, 1.0
  %v619 = vadd.f32 %v598, 1.0
  %v620 = vadd.f32 %v600, 1.0
  %v621 = vadd.f32 %v602, 1.0
  %v622 = vadd.f32 %v604, 1.0
  %v623 = vadd.f32 %v606, 1.0
  %v624 = vadd.f32 %v608, 1.0
  %v625 = vrcp.pop %v609
  %v626 = vmul.f32 1.0, %v625
  %v627 = vrcp.pop %v610
  %v628 = vmul.f32 1.0, %v627
  %v629 = vrcp.pop %v611
  %v630 = vmul.f32 1.0, %v629
  %v631 = vrcp.pop %v612
  %v632 = vmul.f32 1.0, %v631
  %v633 = vrcp.pop %v613
  %v634 = vmul.f32 1.0, %v633
  %v635 = vrcp.pop %v614
  %v636 = vmul.f32 1.0, %v635
  %v637 = vrcp.pop %v615
  %v638 = vmul.f32 1.0, %v637
  %v639 = vrcp.pop %v616
  %v640 = vmul.f32 1.0, %v639
  %v641 = vrcp.pop %v617
  %v642 = vmul.f32 1.0, %v641
  %v643 = vrcp.pop %v618
  %v644 = vmul.f32 1.0, %v643
  %v645 = vrcp.pop %v619
  %v646 = vmul.f32 1.0, %v645
  %v647 = vrcp.pop %v620
  %v648 = vmul.f32 1.0, %v647
  %v649 = vrcp.pop %v621
  %v650 = vmul.f32 1.0, %v649
  %v651 = vrcp.pop %v622
  %v652 = vmul.f32 1.0, %v651
  %v653 = vrcp.pop %v623
  %v654 = vmul.f32 1.0, %v653
  %v655 = vrcp.pop %v624
  %v656 = vmul.f32 1.0, %v655
  %vm657 = vcmask 7168
  %658 = vst.msk [vmem:[%s5] sm:$0xff] %vm657, %v626
  %659 = vst.msk [vmem:[%s5 + $0x8] sm:$0xff] %vm657, %v628
  %660 = vst.msk [vmem:[%s5 + $0x10] sm:$0xff] %vm657, %v630
  %661 = vst.msk [vmem:[%s5 + $0x18] sm:$0xff] %vm657, %v632
  %662 = vst.msk [vmem:[%s5 + $0x20] sm:$0xff] %vm657, %v634
  %663 = vst.msk [vmem:[%s5 + $0x28] sm:$0xff] %vm657, %v636
  %664 = vst.msk [vmem:[%s5 + $0x30] sm:$0xff] %vm657, %v638
  %665 = vst.msk [vmem:[%s5 + $0x38] sm:$0xff] %vm657, %v640
  %666 = vst.msk [vmem:[%s5 + $0x40] sm:$0xff] %vm657, %v642
  %667 = vst.msk [vmem:[%s5 + $0x48] sm:$0xff] %vm657, %v644
  %668 = vst.msk [vmem:[%s5 + $0x50] sm:$0xff] %vm657, %v646
  %669 = vst.msk [vmem:[%s5 + $0x58] sm:$0xff] %vm657, %v648
  %670 = vst.msk [vmem:[%s5 + $0x60] sm:$0xff] %vm657, %v650
  %671 = vst.msk [vmem:[%s5 + $0x68] sm:$0xff] %vm657, %v652
  %672 = vst.msk [vmem:[%s5 + $0x70] sm:$0xff] %vm657, %v654
  %673 = vst.msk [vmem:[%s5 + $0x78] sm:$0xff] %vm657, %v656
  // Predicated region
  $region22: #{tpu_custom_call.1} parent=0 // pred_check
    _
  $region23: #{tpu_custom_call.1} parent=0 // pred_check_branch
    %675 = sbr.rel (0) target = $region25
  $region24: #{tpu_custom_call.1} parent=0 // pred_region
    _
  $region25: #{tpu_custom_call.1} parent=0 // pred_fallthru
    _
  // Predicated region
  $region26: #{tpu_custom_call.1} parent=0 // pred_check
    _
  $region27: #{tpu_custom_call.1} parent=0 // pred_check_branch
    %677 = sbr.rel (0) target = $region29
  $region28: #{tpu_custom_call.1} parent=0 // pred_region
    _
  $region29: #{tpu_custom_call.1} parent=0 // pred_fallthru
    _

</llo_original>
